<compile_context>
chip_gen: v7x
topology: tpu7x:2x2x1
jax: 0.10.0
libtpu: 0.0.40
codegen_flags: <defaults>
</compile_context>

<pallas_src>
import functools

import jax
import jax.numpy as jnp
from jax.experimental import pallas as pl
from jax.experimental.pallas import tpu as pltpu


# ----------------------------------------------------------------------------
# Pallas kernels
# ----------------------------------------------------------------------------
def gcn_fused_kernel(a_ref, x_ref, w1_ref, b1_ref, w2_ref, b2_ref,
                     w3_ref, b3_ref, o_ref):
    """Per-graph fused 3x (GCNConv + ReLU):  h <- relu(A @ (h @ W) + b).

    `a_ref` has a CONSTANT index_map, so the shared normalized adjacency stays
    VMEM-resident across the whole batch grid (one HBM fetch per forward).
    Intermediates never leave VMEM; MXU accumulation is f32 even when A / hw
    are bf16.
    """
    a = a_ref[...]                       # (Np_pad, Np_pad), bf16 (or f32)
    h = x_ref[...]                       # (Np_pad, F_in), f32
    for w_ref, b_ref in ((w1_ref, b1_ref), (w2_ref, b2_ref), (w3_ref, b3_ref)):
        hw = jnp.dot(h, w_ref[...], preferred_element_type=jnp.float32)
        h = jnp.maximum(
            jnp.dot(a, hw.astype(a.dtype), preferred_element_type=jnp.float32)
            + b_ref[...],
            0.0)
    o_ref[...] = h.astype(o_ref.dtype)


def head_kernel(x_ref, w1_ref, b1_ref, g_ref, bt_ref, w2_ref, b2_ref, o_ref):
    """Linear -> BatchNorm1d (batch statistics, eps=1e-5) -> ReLU -> Linear."""
    h = jnp.dot(x_ref[...], w1_ref[...],
                preferred_element_type=jnp.float32) + b1_ref[...]
    mean = jnp.mean(h, axis=0, keepdims=True)
    var = jnp.mean((h - mean) ** 2, axis=0, keepdims=True)  # biased var (PyTorch BN)
    hn = g_ref[...] * (h - mean) * jax.lax.rsqrt(var + 1e-5) + bt_ref[...]
    hr = jnp.maximum(hn, 0.0)
    o_ref[...] = (jnp.dot(hr, w2_ref[...], preferred_element_type=jnp.float32)
                  + b2_ref[...]).astype(o_ref.dtype)


# ----------------------------------------------------------------------------
# Wrappers
# ----------------------------------------------------------------------------
def _round_up(x, m):
    return (x + m - 1) // m * m


def padded_n_pmts(n_pmts):
    """Lane/MXU-friendly padding target for the node dimension."""
    align = 128 if n_pmts >= 256 else 8
    return _round_up(n_pmts, align)


def _full_spec(shape):
    """Single-block spec covering the whole array (no grid)."""
    return pl.BlockSpec(shape, lambda: tuple(0 for _ in shape))


def gcn_stack(a_norm, x_blocks, params, *, use_bf16=True):
    """Fused 3-layer GCN with a batch-shared normalized adjacency.

    a_norm:   (Np_pad, Np_pad)        -- shared across all graphs in the batch
    x_blocks: (batch, Np_pad, F_in)
    returns   (batch, Np_pad, final_out)
    """
    batch, n_pad, f_in = x_blocks.shape
    assert a_norm.shape == (n_pad, n_pad)
    f_mid1 = params["w_c1"].shape[1]
    f_mid2 = params["w_c2"].shape[1]
    f_out = params["w_c3"].shape[1]

    if use_bf16:
        # Halves the dominant HBM bytes (A) and uses the bf16-native MXU on
        # v6e/v7x; accumulation stays f32 inside the kernel.
        a_norm = a_norm.astype(jnp.bfloat16)

    per_graph3 = lambda g: (g, 0, 0)
    shared2 = lambda g: (0, 0)          # constant -> block stays VMEM-resident

    a_bytes = n_pad * n_pad * a_norm.dtype.itemsize
    compiler_kw = dict(dimension_semantics=("parallel",))
    a_spec_kw = {}
    if a_bytes > (12 << 20):
        # Production Np (~2330 -> 2432): the shared A block is fetched exactly
        # once (constant index_map), so single-buffer it to halve resident
        # VMEM and raise the scoped limit.  bf16 A (~11.3 MiB) + headroom fits
        # v7x's 64 MiB physical VMEM; v5e/v6e (128 MiB) are comfortable.
        a_spec_kw["pipeline_mode"] = pl.Buffered(1)
        compiler_kw["vmem_limit_bytes"] = int(min(a_bytes + (16 << 20), 60 << 20))

    flops = 2 * batch * (n_pad * n_pad * (f_mid1 + f_mid2 + f_out)
                         + n_pad * (f_in * f_mid1 + f_mid1 * f_mid2
                                    + f_mid2 * f_out))
    bytes_accessed = (a_norm.size * a_norm.dtype.itemsize          # fetched once
                      + x_blocks.size * x_blocks.dtype.itemsize
                      + batch * n_pad * f_out * 4)

    return pl.pallas_call(
        gcn_fused_kernel,
        out_shape=jax.ShapeDtypeStruct((batch, n_pad, f_out), jnp.float32),
        grid_spec=pltpu.PrefetchScalarGridSpec(
            num_scalar_prefetch=0,
            grid=(batch,),
            in_specs=[
                pl.BlockSpec((n_pad, n_pad), shared2, **a_spec_kw),
                pl.BlockSpec((None, n_pad, f_in), per_graph3),
                pl.BlockSpec((f_in, f_mid1), shared2),
                pl.BlockSpec((1, f_mid1), shared2),
                pl.BlockSpec((f_mid1, f_mid2), shared2),
                pl.BlockSpec((1, f_mid2), shared2),
                pl.BlockSpec((f_mid2, f_out), shared2),
                pl.BlockSpec((1, f_out), shared2),
            ],
            out_specs=pl.BlockSpec((None, n_pad, f_out), per_graph3),
        ),
        compiler_params=pltpu.CompilerParams(**compiler_kw),
        cost_estimate=pl.CostEstimate(flops=flops, transcendentals=0,
                                      bytes_accessed=bytes_accessed),
    )(a_norm, x_blocks,
      params["w_c1"], params["b_c1"].reshape(1, -1),
      params["w_c2"], params["b_c2"].reshape(1, -1),
      params["w_c3"], params["b_c3"].reshape(1, -1))


def head(x, w1, b1, gamma, beta, w2, b2):
    """Readout head on (batch, n_pmts * final_out).  Tiny; one pallas_call."""
    bsz = x.shape[0]
    return pl.pallas_call(
        head_kernel,
        out_shape=jax.ShapeDtypeStruct((bsz, 1), jnp.float32),
        in_specs=[_full_spec(x.shape), _full_spec(w1.shape),
                  _full_spec((1, w1.shape[1])), _full_spec((1, w1.shape[1])),
                  _full_spec((1, w1.shape[1])), _full_spec(w2.shape),
                  _full_spec((1, 1))],
        out_specs=_full_spec((bsz, 1)),
    )(x, w1, b1.reshape(1, -1), gamma.reshape(1, -1), beta.reshape(1, -1),
      w2, b2.reshape(1, 1))


def build_shared_normalized_adjacency(edge_index, n_pmts, n_pmts_pad=None):
    """Normalized adjacency D^{-1/2}(A+I)D^{-1/2} for the SHARED topology.

    Built once (outside the jitted step) from the edges of graph 0 of the
    batched edge_index; assumes PyG-style node-contiguous batching where every
    graph has the same (fixed detector) topology.  Padded rows/cols (indices
    >= n_pmts) are all zero so they cannot influence real nodes.
    """
    if n_pmts_pad is None:
        n_pmts_pad = n_pmts
    src = edge_index[0].astype(jnp.int32)
    dst = edge_index[1].astype(jnp.int32)
    keep = (src < n_pmts) & (dst < n_pmts)          # graph-0 edges only
    src0 = jnp.where(keep, src, n_pmts_pad)         # out-of-range -> dropped
    dst0 = jnp.where(keep, dst, n_pmts_pad)
    a = jnp.zeros((n_pmts_pad, n_pmts_pad), jnp.float32)
    # .add (not .set) so duplicate edges count in the degree like PyG GCNConv.
    a = a.at[dst0, src0].add(1.0, mode="drop")
    ii = jnp.arange(n_pmts)
    a = a.at[ii, ii].add(1.0)                       # self loops on real nodes
    deg = jnp.sum(a, axis=1)
    d_inv_sqrt = jnp.where(deg > 0, jax.lax.rsqrt(deg), 0.0)
    return d_inv_sqrt[:, None] * a * d_inv_sqrt[None, :]


def gcn_net_forward(x, a_norm, params, n_pmts, final_out, use_bf16=True):
    """x: (batch*n_pmts, 5); a_norm: (Np_pad, Np_pad) shared normalized A."""
    n_pad = a_norm.shape[0]
    batch = x.shape[0] // n_pmts
    xb = x.reshape(batch, n_pmts, -1)
    if n_pad != n_pmts:
        xb = jnp.pad(xb, ((0, 0), (0, n_pad - n_pmts), (0, 0)))
    h = gcn_stack(a_norm, xb, params, use_bf16=use_bf16)   # (B, Np_pad, 3)
    h = h[:, :n_pmts, :]                 # drop padded rows before the flatten
    # Row-major flatten == torch .view(-1, final_out * n_pmts); contiguous.
    h = h.reshape(batch, n_pmts * final_out)
    # TODO(synk): BatchNorm1d running_mean/var (eval mode) are not tracked;
    # this matches the PyTorch module in training mode (batch statistics).
    return head(h, params["w_l1"], params["b_l1"],
                params["bn_gamma"], params["bn_beta"],
                params["w_l2"], params["b_l2"])             # (batch, 1)


# ----------------------------------------------------------------------------
# Deterministic parameter init + example run
# ----------------------------------------------------------------------------
def glorot(key, shape):
    lim = jnp.sqrt(6.0 / (shape[0] + shape[1]))
    return jax.random.uniform(key, shape, jnp.float32, -lim, lim)


if __name__ == "__main__":
    # small, forward-consistent shapes (n_pmts=60 deliberately exercises the
    # pad-to-64 + slice-back path; production n_pmts=2330 pads to 2432)
    final_out = 3
    n_pmts = 60
    batch = 2
    in_feat = 5
    n_nodes = batch * n_pmts
    n_pad = padded_n_pmts(n_pmts)

    key = jax.random.PRNGKey(0)
    keys = jax.random.split(key, 8)

    params = {
        "w_c1": glorot(keys[0], (in_feat, 32)),
        "b_c1": jnp.zeros((32,), jnp.float32),
        "w_c2": glorot(keys[1], (32, 16)),
        "b_c2": jnp.zeros((16,), jnp.float32),
        "w_c3": glorot(keys[2], (16, final_out)),
        "b_c3": jnp.zeros((final_out,), jnp.float32),
        "w_l1": glorot(keys[3], (n_pmts * final_out, 32)),
        "b_l1": jax.random.uniform(keys[4], (32,), jnp.float32, -0.05, 0.05),
        "bn_gamma": jnp.ones((32,), jnp.float32),
        "bn_beta": jnp.zeros((32,), jnp.float32),
        "w_l2": glorot(keys[5], (32, 1)),
        "b_l2": jax.random.uniform(keys[6], (1,), jnp.float32, -0.05, 0.05),
    }

    # deterministic node features
    x = jax.random.normal(keys[7], (n_nodes, in_feat), jnp.float32)

    # deterministic ring graph inside each disjoint graph (same topology in
    # every graph, both edge directions), shape (2, E)
    node_ids = jnp.arange(n_nodes)
    graph_base = (node_ids // n_pmts) * n_pmts
    nxt = graph_base + (node_ids % n_pmts + 1) % n_pmts
    src = jnp.concatenate([node_ids, nxt])
    dst = jnp.concatenate([nxt, node_ids])
    edge_index = jnp.stack([src, dst]).astype(jnp.int32)

    # Shared normalized adjacency built ONCE outside the jitted step
    # (static detector geometry => no per-forward reconstruction traffic).
    a_norm = build_shared_normalized_adjacency(edge_index, n_pmts, n_pad)

    fwd = jax.jit(functools.partial(gcn_net_forward,
                                    n_pmts=n_pmts, final_out=final_out))
    out = jax.block_until_ready(fwd(x, a_norm, params))
    assert out.shape == (batch, 1)
    assert bool(jnp.all(jnp.isfinite(out)))
    print("KERNEL_OK")
</pallas_src>

<mosaic_0001>
module attributes {stable_mosaic.version = 11 : i64} {
  func.func @gcn_fused_kernel(%arg0: i32, %arg1: memref<64x64xbf16, #tpu.memory_space<vmem>>, %arg2: memref<1x64x5xf32, #tpu.memory_space<vmem>>, %arg3: memref<5x32xf32, #tpu.memory_space<vmem>>, %arg4: memref<1x32xf32, #tpu.memory_space<vmem>>, %arg5: memref<32x16xf32, #tpu.memory_space<vmem>>, %arg6: memref<1x16xf32, #tpu.memory_space<vmem>>, %arg7: memref<16x3xf32, #tpu.memory_space<vmem>>, %arg8: memref<1x3xf32, #tpu.memory_space<vmem>>, %arg9: memref<1x64x3xf32, #tpu.memory_space<vmem>>) attributes {dimension_semantics = [#tpu.dimension_semantics<parallel>], iteration_bounds = array<i64: 2>, scalar_prefetch = 0 : i64, scratch_operands = 0 : i64, tpu.core_type = #tpu.core_type<tc>, window_params = [{pipeline_mode = #tpu.pipeline_mode<synchronous>, transform_indices = @transform_0, window_bounds = array<i64: 64, 64>}, {transform_indices = @transform_1, window_bounds = array<i64: 1, 64, 5>}, {pipeline_mode = #tpu.pipeline_mode<synchronous>, transform_indices = @transform_2, window_bounds = array<i64: 5, 32>}, {pipeline_mode = #tpu.pipeline_mode<synchronous>, transform_indices = @transform_3, window_bounds = array<i64: 1, 32>}, {pipeline_mode = #tpu.pipeline_mode<synchronous>, transform_indices = @transform_4, window_bounds = array<i64: 32, 16>}, {pipeline_mode = #tpu.pipeline_mode<synchronous>, transform_indices = @transform_5, window_bounds = array<i64: 1, 16>}, {pipeline_mode = #tpu.pipeline_mode<synchronous>, transform_indices = @transform_6, window_bounds = array<i64: 16, 3>}, {pipeline_mode = #tpu.pipeline_mode<synchronous>, transform_indices = @transform_7, window_bounds = array<i64: 1, 3>}, {transform_indices = @transform_8, window_bounds = array<i64: 1, 64, 3>}]} {
    %c0 = arith.constant 0 : index
    %c0_0 = arith.constant 0 : index
    %0 = vector.load %arg1[%c0, %c0_0] : memref<64x64xbf16, #tpu.memory_space<vmem>>, vector<64x64xbf16>
    %c0_1 = arith.constant 0 : index
    %c0_2 = arith.constant 0 : index
    %c0_3 = arith.constant 0 : index
    %1 = vector.load %arg2[%c0_1, %c0_2, %c0_3] : memref<1x64x5xf32, #tpu.memory_space<vmem>>, vector<1x64x5xf32>
    %2 = vector.shape_cast %1 : vector<1x64x5xf32> to vector<64x5xf32>
    %c0_4 = arith.constant 0 : index
    %c0_5 = arith.constant 0 : index
    %3 = vector.load %arg3[%c0_4, %c0_5] : memref<5x32xf32, #tpu.memory_space<vmem>>, vector<5x32xf32>
    %cst = arith.constant dense<0.000000e+00> : vector<64x32xf32>
    %4 = tpu.matmul %2, %3, %cst {dimension_numbers = #tpu.dot_dimension_numbers<[1], [0], [0], [1], [0, 0, 1, 1], [], []>} : vector<64x5xf32>, vector<5x32xf32>, vector<64x32xf32> -> vector<64x32xf32>
    %5 = arith.truncf %4 : vector<64x32xf32> to vector<64x32xbf16>
    %cst_6 = arith.constant dense<0.000000e+00> : vector<64x32xf32>
    %6 = tpu.matmul %0, %5, %cst_6 {dimension_numbers = #tpu.dot_dimension_numbers<[1], [0], [0], [1], [0, 0, 1, 1], [], []>} : vector<64x64xbf16>, vector<64x32xbf16>, vector<64x32xf32> -> vector<64x32xf32>
    %c0_7 = arith.constant 0 : index
    %c0_8 = arith.constant 0 : index
    %7 = vector.load %arg4[%c0_7, %c0_8] : memref<1x32xf32, #tpu.memory_space<vmem>>, vector<1x32xf32>
    %8 = vector.broadcast %7 : vector<1x32xf32> to vector<64x32xf32>
    %9 = arith.addf %6, %8 : vector<64x32xf32>
    %cst_9 = arith.constant 0.000000e+00 : f32
    %10 = vector.broadcast %cst_9 : f32 to vector<64x32xf32>
    %11 = arith.maximumf %9, %10 : vector<64x32xf32>
    %c0_10 = arith.constant 0 : index
    %c0_11 = arith.constant 0 : index
    %12 = vector.load %arg5[%c0_10, %c0_11] : memref<32x16xf32, #tpu.memory_space<vmem>>, vector<32x16xf32>
    %cst_12 = arith.constant dense<0.000000e+00> : vector<64x16xf32>
    %13 = tpu.matmul %11, %12, %cst_12 {dimension_numbers = #tpu.dot_dimension_numbers<[1], [0], [0], [1], [0, 0, 1, 1], [], []>} : vector<64x32xf32>, vector<32x16xf32>, vector<64x16xf32> -> vector<64x16xf32>
    %14 = arith.truncf %13 : vector<64x16xf32> to vector<64x16xbf16>
    %cst_13 = arith.constant dense<0.000000e+00> : vector<64x16xf32>
    %15 = tpu.matmul %0, %14, %cst_13 {dimension_numbers = #tpu.dot_dimension_numbers<[1], [0], [0], [1], [0, 0, 1, 1], [], []>} : vector<64x64xbf16>, vector<64x16xbf16>, vector<64x16xf32> -> vector<64x16xf32>
    %c0_14 = arith.constant 0 : index
    %c0_15 = arith.constant 0 : index
    %16 = vector.load %arg6[%c0_14, %c0_15] : memref<1x16xf32, #tpu.memory_space<vmem>>, vector<1x16xf32>
    %17 = vector.broadcast %16 : vector<1x16xf32> to vector<64x16xf32>
    %18 = arith.addf %15, %17 : vector<64x16xf32>
    %cst_16 = arith.constant 0.000000e+00 : f32
    %19 = vector.broadcast %cst_16 : f32 to vector<64x16xf32>
    %20 = arith.maximumf %18, %19 : vector<64x16xf32>
    %c0_17 = arith.constant 0 : index
    %c0_18 = arith.constant 0 : index
    %21 = vector.load %arg7[%c0_17, %c0_18] : memref<16x3xf32, #tpu.memory_space<vmem>>, vector<16x3xf32>
    %cst_19 = arith.constant dense<0.000000e+00> : vector<64x3xf32>
    %22 = tpu.matmul %20, %21, %cst_19 {dimension_numbers = #tpu.dot_dimension_numbers<[1], [0], [0], [1], [0, 0, 1, 1], [], []>} : vector<64x16xf32>, vector<16x3xf32>, vector<64x3xf32> -> vector<64x3xf32>
    %23 = arith.truncf %22 : vector<64x3xf32> to vector<64x3xbf16>
    %cst_20 = arith.constant dense<0.000000e+00> : vector<64x3xf32>
    %24 = tpu.matmul %0, %23, %cst_20 {dimension_numbers = #tpu.dot_dimension_numbers<[1], [0], [0], [1], [0, 0, 1, 1], [], []>} : vector<64x64xbf16>, vector<64x3xbf16>, vector<64x3xf32> -> vector<64x3xf32>
    %c0_21 = arith.constant 0 : index
    %c0_22 = arith.constant 0 : index
    %25 = vector.load %arg8[%c0_21, %c0_22] : memref<1x3xf32, #tpu.memory_space<vmem>>, vector<1x3xf32>
    %26 = vector.broadcast %25 : vector<1x3xf32> to vector<64x3xf32>
    %27 = arith.addf %24, %26 : vector<64x3xf32>
    %cst_23 = arith.constant 0.000000e+00 : f32
    %28 = vector.broadcast %cst_23 : f32 to vector<64x3xf32>
    %29 = arith.maximumf %27, %28 : vector<64x3xf32>
    %c0_24 = arith.constant 0 : index
    %c0_25 = arith.constant 0 : index
    %c0_26 = arith.constant 0 : index
    %30 = vector.load %arg9[%c0_24, %c0_25, %c0_26] : memref<1x64x3xf32, #tpu.memory_space<vmem>>, vector<1x64x3xf32>
    %31 = vector.shape_cast %30 : vector<1x64x3xf32> to vector<64x3xf32>
    %32 = vector.shape_cast %29 : vector<64x3xf32> to vector<1x64x3xf32>
    tpu.vector_store %arg9[%c0_24, %c0_25, %c0_26], %32 {strides = array<i32>} : memref<1x64x3xf32, #tpu.memory_space<vmem>>, vector<1x64x3xf32>,
    return
  }
  func.func @transform_0(%arg0: i32) -> (i32, i32) {
    %c0_i32 = arith.constant 0 : i32
    %c0_i32_0 = arith.constant 0 : i32
    %c0_i32_1 = arith.constant 0 : i32
    return %c0_i32, %c0_i32_0 : i32, i32
  }
  func.func @transform_1(%arg0: i32) -> (i32, i32, i32) {
    %c0_i32 = arith.constant 0 : i32
    %c0_i32_0 = arith.constant 0 : i32
    %c0_i32_1 = arith.constant 0 : i32
    return %arg0, %c0_i32, %c0_i32_0 : i32, i32, i32
  }
  func.func @transform_2(%arg0: i32) -> (i32, i32) {
    %c0_i32 = arith.constant 0 : i32
    %c0_i32_0 = arith.constant 0 : i32
    %c0_i32_1 = arith.constant 0 : i32
    return %c0_i32, %c0_i32_0 : i32, i32
  }
  func.func @transform_3(%arg0: i32) -> (i32, i32) {
    %c0_i32 = arith.constant 0 : i32
    %c0_i32_0 = arith.constant 0 : i32
    %c0_i32_1 = arith.constant 0 : i32
    return %c0_i32, %c0_i32_0 : i32, i32
  }
  func.func @transform_4(%arg0: i32) -> (i32, i32) {
    %c0_i32 = arith.constant 0 : i32
    %c0_i32_0 = arith.constant 0 : i32
    %c0_i32_1 = arith.constant 0 : i32
    return %c0_i32, %c0_i32_0 : i32, i32
  }
  func.func @transform_5(%arg0: i32) -> (i32, i32) {
    %c0_i32 = arith.constant 0 : i32
    %c0_i32_0 = arith.constant 0 : i32
    %c0_i32_1 = arith.constant 0 : i32
    return %c0_i32, %c0_i32_0 : i32, i32
  }
  func.func @transform_6(%arg0: i32) -> (i32, i32) {
    %c0_i32 = arith.constant 0 : i32
    %c0_i32_0 = arith.constant 0 : i32
    %c0_i32_1 = arith.constant 0 : i32
    return %c0_i32, %c0_i32_0 : i32, i32
  }
  func.func @transform_7(%arg0: i32) -> (i32, i32) {
    %c0_i32 = arith.constant 0 : i32
    %c0_i32_0 = arith.constant 0 : i32
    %c0_i32_1 = arith.constant 0 : i32
    return %c0_i32, %c0_i32_0 : i32, i32
  }
  func.func @transform_8(%arg0: i32) -> (i32, i32, i32) {
    %c0_i32 = arith.constant 0 : i32
    %c0_i32_0 = arith.constant 0 : i32
    %c0_i32_1 = arith.constant 0 : i32
    return %arg0, %c0_i32, %c0_i32_0 : i32, i32, i32
  }
}

module attributes {stable_mosaic.version = 11 : i64} {
  func.func @head_kernel(%arg0: memref<2x180xf32, #tpu.memory_space<vmem>>, %arg1: memref<180x32xf32, #tpu.memory_space<vmem>>, %arg2: memref<1x32xf32, #tpu.memory_space<vmem>>, %arg3: memref<1x32xf32, #tpu.memory_space<vmem>>, %arg4: memref<1x32xf32, #tpu.memory_space<vmem>>, %arg5: memref<32x1xf32, #tpu.memory_space<vmem>>, %arg6: memref<1x1xf32, #tpu.memory_space<vmem>>, %arg7: memref<2x1xf32, #tpu.memory_space<vmem>>) attributes {dimension_semantics = [], scalar_prefetch = 0 : i64, scratch_operands = 0 : i64, tpu.core_type = #tpu.core_type<tc>} {
    %c0 = arith.constant 0 : index
    %c0_0 = arith.constant 0 : index
    %0 = vector.load %arg0[%c0, %c0_0] : memref<2x180xf32, #tpu.memory_space<vmem>>, vector<2x180xf32>
    %c0_1 = arith.constant 0 : index
    %c0_2 = arith.constant 0 : index
    %1 = vector.load %arg1[%c0_1, %c0_2] : memref<180x32xf32, #tpu.memory_space<vmem>>, vector<180x32xf32>
    %cst = arith.constant dense<0.000000e+00> : vector<2x32xf32>
    %2 = tpu.matmul %0, %1, %cst {dimension_numbers = #tpu.dot_dimension_numbers<[1], [0], [0], [1], [0, 0, 1, 1], [], []>} : vector<2x180xf32>, vector<180x32xf32>, vector<2x32xf32> -> vector<2x32xf32>
    %c0_3 = arith.constant 0 : index
    %c0_4 = arith.constant 0 : index
    %3 = vector.load %arg2[%c0_3, %c0_4] : memref<1x32xf32, #tpu.memory_space<vmem>>, vector<1x32xf32>
    %4 = vector.broadcast %3 : vector<1x32xf32> to vector<2x32xf32>
    %5 = arith.addf %2, %4 : vector<2x32xf32>
    %cst_5 = arith.constant dense<0.000000e+00> : vector<32xf32>
    %6 = vector.multi_reduction <add>, %5, %cst_5 [0] : vector<2x32xf32> to vector<32xf32>
    %7 = vector.shape_cast %6 : vector<32xf32> to vector<1x32xf32>
    %cst_6 = arith.constant 2.000000e+00 : f32
    %8 = vector.broadcast %cst_6 : f32 to vector<1x32xf32>
    %9 = arith.divf %7, %8 : vector<1x32xf32>
    %10 = vector.broadcast %9 : vector<1x32xf32> to vector<2x32xf32>
    %11 = arith.subf %5, %10 : vector<2x32xf32>
    %12 = arith.mulf %11, %11 : vector<2x32xf32>
    %cst_7 = arith.constant dense<0.000000e+00> : vector<32xf32>
    %13 = vector.multi_reduction <add>, %12, %cst_7 [0] : vector<2x32xf32> to vector<32xf32>
    %14 = vector.shape_cast %13 : vector<32xf32> to vector<1x32xf32>
    %cst_8 = arith.constant 2.000000e+00 : f32
    %15 = vector.broadcast %cst_8 : f32 to vector<1x32xf32>
    %16 = arith.divf %14, %15 : vector<1x32xf32>
    %c0_9 = arith.constant 0 : index
    %c0_10 = arith.constant 0 : index
    %17 = vector.load %arg3[%c0_9, %c0_10] : memref<1x32xf32, #tpu.memory_space<vmem>>, vector<1x32xf32>
    %18 = vector.broadcast %9 : vector<1x32xf32> to vector<2x32xf32>
    %19 = arith.subf %5, %18 : vector<2x32xf32>
    %20 = vector.broadcast %17 : vector<1x32xf32> to vector<2x32xf32>
    %21 = arith.mulf %20, %19 : vector<2x32xf32>
    %cst_11 = arith.constant 9.99999974E-6 : f32
    %22 = vector.broadcast %cst_11 : f32 to vector<1x32xf32>
    %23 = arith.addf %16, %22 : vector<1x32xf32>
    %24 = math.rsqrt %23 : vector<1x32xf32>
    %25 = vector.broadcast %24 : vector<1x32xf32> to vector<2x32xf32>
    %26 = arith.mulf %21, %25 : vector<2x32xf32>
    %c0_12 = arith.constant 0 : index
    %c0_13 = arith.constant 0 : index
    %27 = vector.load %arg4[%c0_12, %c0_13] : memref<1x32xf32, #tpu.memory_space<vmem>>, vector<1x32xf32>
    %28 = vector.broadcast %27 : vector<1x32xf32> to vector<2x32xf32>
    %29 = arith.addf %26, %28 : vector<2x32xf32>
    %cst_14 = arith.constant 0.000000e+00 : f32
    %30 = vector.broadcast %cst_14 : f32 to vector<2x32xf32>
    %31 = arith.maximumf %29, %30 : vector<2x32xf32>
    %c0_15 = arith.constant 0 : index
    %c0_16 = arith.constant 0 : index
    %32 = vector.load %arg5[%c0_15, %c0_16] : memref<32x1xf32, #tpu.memory_space<vmem>>, vector<32x1xf32>
    %cst_17 = arith.constant dense<0.000000e+00> : vector<2x1xf32>
    %33 = tpu.matmul %31, %32, %cst_17 {dimension_numbers = #tpu.dot_dimension_numbers<[1], [0], [0], [1], [0, 0, 1, 1], [], []>} : vector<2x32xf32>, vector<32x1xf32>, vector<2x1xf32> -> vector<2x1xf32>
    %c0_18 = arith.constant 0 : index
    %c0_19 = arith.constant 0 : index
    %34 = vector.load %arg6[%c0_18, %c0_19] : memref<1x1xf32, #tpu.memory_space<vmem>>, vector<1x1xf32>
    %35 = vector.broadcast %34 : vector<1x1xf32> to vector<2x1xf32>
    %36 = arith.addf %33, %35 : vector<2x1xf32>
    %c0_20 = arith.constant 0 : index
    %c0_21 = arith.constant 0 : index
    %37 = vector.load %arg7[%c0_20, %c0_21] : memref<2x1xf32, #tpu.memory_space<vmem>>, vector<2x1xf32>
    tpu.vector_store %arg7[%c0_20, %c0_21], %36 {strides = array<i32>} : memref<2x1xf32, #tpu.memory_space<vmem>>, vector<2x1xf32>,
    return
  }
}

</mosaic_0001>

<llo_original>
// kernel: gcn_net_forward.3
$region0: #{gcn_net_forward.3}
  #allocation0 [shape = 'u32[]', space=smem, size = 0x4, offset = 0x4, fixed_abs, tag = 'smem constant byte address 0x4 - core index']
  #allocation1 [shape = 'u32[144,128]{1,0:T(1,128)}', space=vmem, size = 0x12000, scoped, tag = 'internal scratch']
  #allocation2 [shape = 'f32[1,1]{1,0:T(1,128)S(1)}', space=vmem, size = 0x200, scoped, tag = 'scoped memory for gcn_net_forward.3']
  %s0 = inlined_call_operand.vmem [shape: f32[2,180], index: 0, kind: input, shape index: {}]
  %s1 = inlined_call_operand.vmem [shape: f32[180,32], index: 1, kind: input, shape index: {}]
  %s2 = inlined_call_operand.vmem [shape: f32[1,32], index: 2, kind: input, shape index: {}]
  %s3 = inlined_call_operand.vmem [shape: f32[1,32], index: 3, kind: input, shape index: {}]
  %s4 = inlined_call_operand.vmem [shape: f32[1,32], index: 4, kind: input, shape index: {}]
  %s5 = inlined_call_operand.vmem [shape: f32[32,1], index: 5, kind: input, shape index: {}]
  %s6 = inlined_call_operand.<no memory space> [shape: f32[1,1], index: 6, kind: input, shape index: {}]
  %s7 = inlined_call_operand.vmem [shape: f32[2,1], index: 7, kind: output, shape index: {}]
  %s8 = sld [smem:[#allocation0]]
  $region38: #{gcn_net_forward.3} parent=0
    _
  %s10 = ssub.s32 1, %s8
  %s11 = scalar_select 0, %s10, %s8
  %v12 = vstv %s6
  %13 = vst [vmem:[#allocation2] sm:$0x1] %v12
  // Predicated region
  $region2: #{gcn_net_forward.3} parent=0 // pred_check
    _
  $region3: #{gcn_net_forward.3} parent=0 // pred_check_branch
    %15 = sbr.rel (0) target = $region5
  $region4: #{gcn_net_forward.3} parent=0 // pred_region
    _
  $region5: #{gcn_net_forward.3} parent=0 // pred_fallthru
    _
  // Predicated region
  $region6: #{gcn_net_forward.3} parent=0 // pred_check
    _
  $region7: #{gcn_net_forward.3} parent=0 // pred_check_branch
    %17 = sbr.rel (0) target = $region9
  $region8: #{gcn_net_forward.3} parent=0 // pred_region
    _
  $region9: #{gcn_net_forward.3} parent=0 // pred_fallthru
    _
  // Predicated region
  $region10: #{gcn_net_forward.3} parent=0 // pred_check
    _
  $region11: #{gcn_net_forward.3} parent=0 // pred_check_branch
    %19 = sbr.rel (0) target = $region13
  $region12: #{gcn_net_forward.3} parent=0 // pred_region
    _
  $region13: #{gcn_net_forward.3} parent=0 // pred_fallthru
    _
  // Predicated region
  $region14: #{gcn_net_forward.3} parent=0 // pred_check
    _
  $region15: #{gcn_net_forward.3} parent=0 // pred_check_branch
    %21 = sbr.rel (0) target = $region17
  $region16: #{gcn_net_forward.3} parent=0 // pred_region
    _
  $region17: #{gcn_net_forward.3} parent=0 // pred_fallthru
    _
  // Predicated region
  $region18: #{gcn_net_forward.3} parent=0 // pred_check
    _
  $region19: #{gcn_net_forward.3} parent=0 // pred_check_branch
    %23 = sbr.rel (0) target = $region21
  $region20: #{gcn_net_forward.3} parent=0 // pred_region
    _
  $region21: #{gcn_net_forward.3} parent=0 // pred_fallthru
    _
  // Predicated region
  $region22: #{gcn_net_forward.3} parent=0 // pred_check
    _
  $region23: #{gcn_net_forward.3} parent=0 // pred_check_branch
    %25 = sbr.rel (0) target = $region25
  $region24: #{gcn_net_forward.3} parent=0 // pred_region
    _
  $region25: #{gcn_net_forward.3} parent=0 // pred_fallthru
    _
  // Predicated region
  $region26: #{gcn_net_forward.3} parent=0 // pred_check
    _
  $region27: #{gcn_net_forward.3} parent=0 // pred_check_branch
    %27 = sbr.rel (0) target = $region29
  $region28: #{gcn_net_forward.3} parent=0 // pred_region
    _
  $region29: #{gcn_net_forward.3} parent=0 // pred_fallthru
    _
  %v28 = vld [vmem:[%s0] sm:$0xf]
  %v29 = vld [vmem:[%s1] sm:$0xff]
  %v30 = vld [vmem:[%s1 + $0x8] sm:$0xff]
  %v31 = vld [vmem:[%s1 + $0x10] sm:$0xff]
  %v32 = vld [vmem:[%s1 + $0x18] sm:$0xff]
  %v33 = vld [vmem:[%s1 + $0x20] sm:$0xff]
  %v34 = vld [vmem:[%s1 + $0x28] sm:$0xff]
  %v35 = vld [vmem:[%s1 + $0x30] sm:$0xff]
  %v36 = vld [vmem:[%s1 + $0x38] sm:$0xff]
  %v37 = vld [vmem:[%s1 + $0x40] sm:$0xff]
  %v38 = vld [vmem:[%s1 + $0x48] sm:$0xff]
  %v39 = vld [vmem:[%s1 + $0x50] sm:$0xff]
  %v40 = vld [vmem:[%s1 + $0x58] sm:$0xff]
  %v41 = vld [vmem:[%s1 + $0x60] sm:$0xff]
  %v42 = vld [vmem:[%s1 + $0x68] sm:$0xff]
  %v43 = vld [vmem:[%s1 + $0x70] sm:$0xff]
  %v44 = vld [vmem:[%s1 + $0x78] sm:$0xff]
  %v45 = vld [vmem:[%s1 + $0x80] sm:$0xff]
  %v46 = vld [vmem:[%s1 + $0x88] sm:$0xff]
  %v47 = vld [vmem:[%s1 + $0x90] sm:$0xff]
  %v48 = vld [vmem:[%s1 + $0x98] sm:$0xff]
  %v49 = vld [vmem:[%s1 + $0xa0] sm:$0xff]
  %v50 = vld [vmem:[%s1 + $0xa8] sm:$0xff]
  %v51 = vld [vmem:[%s1 + $0xb0] sm:$0xf]
  %v52 = vld [vmem:[%s2] sm:$0x1]
  %v54 = vlaneseq
  %v55 = vshrl.u32 %v54, 7
  %v56 = vsub.s32 0, %v55
  %v57 = vrot.slane %v52, %v56
  %v61 = vunpack.c.l.s4 1983009808
  %v62 = vunpack.c.0.s8 %v61
  %v63 = vlaneseq
  %v64 = vshrl.u32 %v63, 7
  %v65 = vsub.s32 %v62, %v64
  %v66 = vrot.slane %v28, %v65
  %v67 = vcombine.high %v66, %v66
  %vm69 = vcmask 424960
  %v70 = vsel %vm69, %v67, 0
  %vm72 = vcmask 1043456
  %v74 = vsel %vm72, %v51, 0
  %76 = vmatprep.subr.mxu0 0.0
  %77 = vmatpush1.msra.mxu0 %v29
  %78 = vmatprep.subr.mxu0 0.0
  %79 = vmatpush1.msra.mxu0 %v30
  %80 = vmatprep.subr.mxu0 0.0
  %81 = vmatpush1.msra.mxu0 %v31
  %82 = vmatprep.subr.mxu0 0.0
  %83 = vmatpush1.msra.mxu0 %v32
  %84 = vmatprep.subr.mxu0 0.0
  %85 = vmatpush1.msra.mxu0 %v33
  %86 = vmatprep.subr.mxu0 0.0
  %87 = vmatpush1.msra.mxu0 %v34
  %88 = vmatprep.subr.mxu0 0.0
  %89 = vmatpush1.msra.mxu0 %v35
  %90 = vmatprep.subr.mxu0 0.0
  %91 = vmatpush1.msra.mxu0 %v36
  %92 = vmatprep.subr.mxu0 0.0
  %93 = vmatpush1.msra.mxu0 %v37
  %94 = vmatprep.subr.mxu0 0.0
  %95 = vmatpush1.msra.mxu0 %v38
  %96 = vmatprep.subr.mxu0 0.0
  %97 = vmatpush1.msra.mxu0 %v39
  %98 = vmatprep.subr.mxu0 0.0
  %99 = vmatpush1.msra.mxu0 %v40
  %100 = vmatprep.subr.mxu0 0.0
  %101 = vmatpush1.msra.mxu0 %v41
  %102 = vmatprep.subr.mxu0 0.0
  %103 = vmatpush1.msra.mxu0 %v42
  %104 = vmatprep.subr.mxu0 0.0
  %105 = vmatpush1.msra.mxu0 %v43
  %106 = vmatprep.subr.mxu0 0.0
  %107 = vmatpush1.msra.mxu0 %v44
  %108 = vmatprep.subr.mxu0 0.0
  %109 = vmatpush1.msra.mxu0 %v45
  %110 = vmatprep.subr.mxu0 0.0
  %111 = vmatpush1.msra.mxu0 %v46
  %112 = vmatprep.subr.mxu0 0.0
  %113 = vmatpush1.msra.mxu0 %v47
  %114 = vmatprep.subr.mxu0 0.0
  %115 = vmatpush1.msra.mxu0 %v48
  %116 = vmatprep.subr.mxu0 0.0
  %117 = vmatpush1.msra.mxu0 %v49
  %118 = vmatprep.subr.mxu0 0.0
  %119 = vmatpush1.msra.mxu0 %v50
  %120 = vmatprep.subr.mxu0 0.0
  %121 = vmatpush1.msra.mxu0 %v74
  %122 = vmatprep.subr.mxu0 0.0
  %123 = vmatpush1.msra.mxu0 0.0
  %124 = vmatprep.subr.mxu0 0.0
  %125 = vmatpush1.msra.mxu0 0.0
  %126 = vmatprep.subr.mxu0 0.0
  %127 = vmatpush1.msra.mxu0 0.0
  %128 = vmatprep.subr.mxu0 0.0
  %129 = vmatpush1.msra.mxu0 0.0
  %130 = vmatprep.subr.mxu0 0.0
  %131 = vmatpush1.msra.mxu0 0.0
  %132 = vmatprep.subr.mxu0 0.0
  %133 = vmatpush1.msra.mxu0 0.0
  %134 = vmatprep.subr.mxu0 0.0
  %135 = vmatpush1.msra.mxu0 0.0
  %136 = vmatprep.subr.mxu0 0.0
  %137 = vmatpush1.msra.mxu0 0.0
  %138 = vmatprep.subr.mxu0 0.0
  %139 = vmatpush1.msra.mxu0 0.0
  %140 = vmatprep.mubr.f32.mxu0 %v70
  %141 = vmatmul.mubr.f32.gmra.mrb[0].mxu0 %v66
  %v142 = vpop.f32.mrb[0].mxu0
  %v143 = vadd.f32 %v57, %v142
  %v144 = vpop.f32.mrb[0].mxu0
  %145 = vdwg.mxu0
  %vm146 = vcmask 254976
  %v147 = vsel %vm146, %v143, 0.0
  %v148 = vrot.slane %v147, 4
  %v149 = vadd.f32 %v147, %v148
  %v150 = vrot.slane %v149, 2
  %v151 = vadd.f32 %v149, %v150
  %v152 = vrot.slane %v151, 1
  %v153 = vadd.f32 %v151, %v152
  %v154 = vrcp.pop 2.0
  %v155 = vmul.f32 %v153, %v154
  %v156 = vsub.f32 %v143, %v155
  %v157 = vmul.f32 %v156, %v156
  %v158 = vsel %vm146, %v157, 0.0
  %v159 = vrot.slane %v158, 4
  %v160 = vadd.f32 %v158, %v159
  %v161 = vrot.slane %v160, 2
  %v162 = vadd.f32 %v160, %v161
  %v163 = vrot.slane %v162, 1
  %v164 = vadd.f32 %v162, %v163
  %v165 = vmul.f32 %v164, %v154
  %v166 = vld [vmem:[%s3] sm:$0x1]
  %v168 = vlaneseq
  %v169 = vshrl.u32 %v168, 7
  %v170 = vsub.s32 0, %v169
  %v171 = vrot.slane %v166, %v170
  %v173 = vmul.f32 %v171, %v156
  %v174 = vadd.f32 %v165, 1e-05
  %v175 = vrsqrt.pop %v174
  %v176 = vmul.f32 %v173, %v175
  %v177 = vld [vmem:[%s4] sm:$0x1]
  %v179 = vlaneseq
  %v180 = vshrl.u32 %v179, 7
  %v181 = vsub.s32 0, %v180
  %v182 = vrot.slane %v177, %v181
  %v184 = vadd.f32 %v176, %v182
  %v185 = vmax.f32 %v184, 0.0
  %v186 = vld [vmem:[%s5] sm:$0xff]
  %v187 = vld [vmem:[%s5 + $0x8] sm:$0xff]
  %v188 = vld [vmem:[%s5 + $0x10] sm:$0xff]
  %v189 = vld [vmem:[%s5 + $0x18] sm:$0xff]
  %v190 = vld [vmem:[#allocation2] sm:$0x1]
  %v192 = vlaneseq
  %v193 = vshrl.u32 %v192, 7
  %v194 = vsub.s32 0, %v193
  %v195 = vrot.slane %v190, %v194
  %vm197 = vcmask 261120
  %v199 = vsel %vm197, %v185, 0
  %201 = vmatprep.subr.mxu0 0.0
  %202 = vmatpush1.msra.mxu0 %v186
  %203 = vmatprep.subr.mxu0 0.0
  %204 = vmatpush1.msra.mxu0 %v187
  %205 = vmatprep.subr.mxu0 0.0
  %206 = vmatpush1.msra.mxu0 %v188
  %207 = vmatprep.subr.mxu0 0.0
  %208 = vmatpush1.msra.mxu0 %v189
  %209 = vmatprep.subr.mxu0 0.0
  %210 = vmatpush1.msra.mxu0 0.0
  %211 = vmatprep.subr.mxu0 0.0
  %212 = vmatpush1.msra.mxu0 0.0
  %213 = vmatprep.subr.mxu0 0.0
  %214 = vmatpush1.msra.mxu0 0.0
  %215 = vmatprep.subr.mxu0 0.0
  %216 = vmatpush1.msra.mxu0 0.0
  %217 = vmatprep.subr.mxu0 0.0
  %218 = vmatpush1.msra.mxu0 0.0
  %219 = vmatprep.subr.mxu0 0.0
  %220 = vmatpush1.msra.mxu0 0.0
  %221 = vmatprep.subr.mxu0 0.0
  %222 = vmatpush1.msra.mxu0 0.0
  %223 = vmatprep.subr.mxu0 0.0
  %224 = vmatpush1.msra.mxu0 0.0
  %225 = vmatprep.subr.mxu0 0.0
  %226 = vmatpush1.msra.mxu0 0.0
  %227 = vmatprep.subr.mxu0 0.0
  %228 = vmatpush1.msra.mxu0 0.0
  %229 = vmatprep.subr.mxu0 0.0
  %230 = vmatpush1.msra.mxu0 0.0
  %231 = vmatprep.subr.mxu0 0.0
  %232 = vmatpush1.msra.mxu0 0.0
  %233 = vmatprep.subr.mxu0 0.0
  %234 = vmatpush1.msra.mxu0 0.0
  %235 = vmatprep.subr.mxu0 0.0
  %236 = vmatpush1.msra.mxu0 0.0
  %237 = vmatprep.subr.mxu0 0.0
  %238 = vmatpush1.msra.mxu0 0.0
  %239 = vmatprep.subr.mxu0 0.0
  %240 = vmatpush1.msra.mxu0 0.0
  %241 = vmatprep.subr.mxu0 0.0
  %242 = vmatpush1.msra.mxu0 0.0
  %243 = vmatprep.subr.mxu0 0.0
  %244 = vmatpush1.msra.mxu0 0.0
  %245 = vmatprep.subr.mxu0 0.0
  %246 = vmatpush1.msra.mxu0 0.0
  %247 = vmatprep.subr.mxu0 0.0
  %248 = vmatpush1.msra.mxu0 0.0
  %249 = vmatprep.subr.mxu0 0.0
  %250 = vmatpush1.msra.mxu0 0.0
  %251 = vmatprep.subr.mxu0 0.0
  %252 = vmatpush1.msra.mxu0 0.0
  %253 = vmatprep.subr.mxu0 0.0
  %254 = vmatpush1.msra.mxu0 0.0
  %255 = vmatprep.subr.mxu0 0.0
  %256 = vmatpush1.msra.mxu0 0.0
  %257 = vmatprep.subr.mxu0 0.0
  %258 = vmatpush1.msra.mxu0 0.0
  %259 = vmatprep.subr.mxu0 0.0
  %260 = vmatpush1.msra.mxu0 0.0
  %261 = vmatprep.subr.mxu0 0.0
  %262 = vmatpush1.msra.mxu0 0.0
  %263 = vmatprep.subr.mxu0 0.0
  %264 = vmatpush1.msra.mxu0 0.0
  %265 = vmatprep.mubr.f32.mxu0 0.0
  %266 = vmatmul.mubr.f32.gmra.mrb[0].mxu0 %v199
  %v267 = vpop.f32.mrb[0].mxu0
  %v268 = vadd.f32 %v195, %v267
  %v269 = vpop.f32.mrb[0].mxu0
  %270 = vdwg.mxu0
  %vm271 = vcmask 1024
  %272 = vst.msk [vmem:[%s7] sm:$0x3] %vm271, %v268
  // Predicated region
  $region30: #{gcn_net_forward.3} parent=0 // pred_check
    _
  $region31: #{gcn_net_forward.3} parent=0 // pred_check_branch
    %274 = sbr.rel (0) target = $region33
  $region32: #{gcn_net_forward.3} parent=0 // pred_region
    _
  $region33: #{gcn_net_forward.3} parent=0 // pred_fallthru
    _
  // Predicated region
  $region34: #{gcn_net_forward.3} parent=0 // pred_check
    _
  $region35: #{gcn_net_forward.3} parent=0 // pred_check_branch
    %276 = sbr.rel (0) target = $region37
  $region36: #{gcn_net_forward.3} parent=0 // pred_region
    _
  $region37: #{gcn_net_forward.3} parent=0 // pred_fallthru
    _

// kernel: gcn_net_forward.2
$region0: #{gcn_net_forward.2}
  #allocation0 [shape = 'u32[]', space=smem, size = 0x4, offset = 0x4, fixed_abs, tag = 'smem constant byte address 0x4 - core index']
  #allocation1 [shape = 'u32[144,128]{1,0:T(1,128)}', space=vmem, size = 0x12000, scoped, tag = 'internal scratch']
  %s0 = inlined_call_operand.vmem [shape: bf16[64,64], index: 0, kind: input, shape index: {}]
  %s1 = inlined_call_operand.vmem [shape: f32[2,64,5], index: 1, kind: input, shape index: {}]
  %s2 = inlined_call_operand.vmem [shape: f32[5,32], index: 2, kind: input, shape index: {}]
  %s3 = inlined_call_operand.vmem [shape: f32[1,32], index: 3, kind: input, shape index: {}]
  %s4 = inlined_call_operand.vmem [shape: f32[32,16], index: 4, kind: input, shape index: {}]
  %s5 = inlined_call_operand.vmem [shape: f32[1,16], index: 5, kind: input, shape index: {}]
  %s6 = inlined_call_operand.vmem [shape: f32[16,3], index: 6, kind: input, shape index: {}]
  %s7 = inlined_call_operand.vmem [shape: f32[1,3], index: 7, kind: input, shape index: {}]
  %s8 = inlined_call_operand.vmem [shape: f32[2,64,3], index: 8, kind: output, shape index: {}]
  %s9 = sld [smem:[#allocation0]]
  $region65: #{gcn_net_forward.2} parent=0
    _
  %s11 = ssub.s32 1, %s9
  %s12 = scalar_select 0, %s11, %s9
  loop: start=0, step=1, limit=4
  $region2: #{gcn_net_forward.2} parent=0 // loop_pre_header
    _
  $region3: #{gcn_net_forward.2} parent=0 // loop_header
    %s14 = sphi 0, %s18
    %p15 = scmp.ge.s32.totalorder %s14, 4
    %s22 = sphi 0, %s22
    %s24 = sphi 0, %s22
    %s25 = sphi 0, %s24
    %s39 = sphi 0, %s25
    %s45 = sphi 0, %s47
    %s48 = sphi 0, %s45
    %s49 = sphi 0, %s48
    %s65 = sphi 0, %s49
    %s69 = sphi 0, %s69
    %s71 = sphi 0, %s69
    %s72 = sphi 0, %s71
    %s86 = sphi 0, %s72
    %s90 = sphi 0, %s90
    %s92 = sphi 0, %s90
    %s93 = sphi 0, %s92
    %s107 = sphi 0, %s93
    %s111 = sphi 0, %s111
    %s113 = sphi 0, %s111
    %s114 = sphi 0, %s113
    %s128 = sphi 0, %s114
    %s132 = sphi 0, %s132
    %s134 = sphi 0, %s132
    %s135 = sphi 0, %s134
    %s149 = sphi 0, %s135
    %s153 = sphi 0, %s153
    %s155 = sphi 0, %s153
    %s156 = sphi 0, %s155
    %s170 = sphi 0, %s156
    %s174 = sphi 0, %s174
    %s176 = sphi 0, %s174
    %s177 = sphi 0, %s176
    %s191 = sphi 0, %s177
    %s197 = sphi 0, %s199
    %s200 = sphi 0, %s197
    %s201 = sphi 0, %s200
    %s217 = sphi 0, %s201
  $region4: #{gcn_net_forward.2} parent=0 // loop_header_branch
    %17 = sbr.rel (%p15) target = $region8
  $region5: #{gcn_net_forward.2} parent=0 // loop_body
    %s19 = ssub.s32 %s14, 1
    %s20 = ssub.s32 %s14, 2
    %s21 = sadd.s32 %s14, 1
    %s23 = sadd.s32 %s22, 1
    %p26 = scmp.eq.s32.totalorder %s14, 1
    %p27 = scmp.ne.s32.totalorder %s22, %s24
    %p28 = scmp.eq.s32.totalorder %s14, 0
    %p29 = por %p27, %p28
    %p30 = scmp.ne.s32.totalorder %s22, %s24
    %p31 = scmp.eq.s32.totalorder %s19, 1
    %p32 = por %p30, %p31
    %p33 = scmp.ne.s32.totalorder %s24, %s25
    %p34 = scmp.eq.s32.totalorder %s19, 0
    %p35 = por %p33, %p34
    %p36 = scmp.ne.s32.totalorder %s24, %s25
    %p37 = scmp.eq.s32.totalorder %s20, 1
    %p38 = por %p36, %p37
    %p40 = scmp.ne.s32.totalorder %s25, %s39
    %p41 = scmp.eq.s32.totalorder %s20, 0
    %p42 = por %p40, %p41
    %s43 = ssub.s32 %s14, %s21
    %p44 = scmp.eq.s32.totalorder %s43, 0
    %s46 = sadd.s32 %s45, 1
    %s47 = scalar_select %p44, %s45, %s46
    %p50 = pneg %p44
    %p51 = scmp.eq.s32.totalorder %s14, 1
    %p52 = por %p50, %p51
    %p53 = scmp.ne.s32.totalorder %s45, %s48
    %p54 = scmp.eq.s32.totalorder %s14, 0
    %p55 = por %p53, %p54
    %p56 = scmp.ne.s32.totalorder %s45, %s48
    %p57 = scmp.eq.s32.totalorder %s19, 1
    %p58 = por %p56, %p57
    %p59 = scmp.ne.s32.totalorder %s48, %s49
    %p60 = scmp.eq.s32.totalorder %s19, 0
    %p61 = por %p59, %p60
    %p62 = scmp.ne.s32.totalorder %s48, %s49
    %p63 = scmp.eq.s32.totalorder %s20, 1
    %p64 = por %p62, %p63
    %p66 = scmp.ne.s32.totalorder %s49, %s65
    %p67 = scmp.eq.s32.totalorder %s20, 0
    %p68 = por %p66, %p67
    %s70 = sadd.s32 %s69, 1
    %p73 = scmp.eq.s32.totalorder %s14, 1
    %p74 = scmp.ne.s32.totalorder %s69, %s71
    %p75 = scmp.eq.s32.totalorder %s14, 0
    %p76 = por %p74, %p75
    %p77 = scmp.ne.s32.totalorder %s69, %s71
    %p78 = scmp.eq.s32.totalorder %s19, 1
    %p79 = por %p77, %p78
    %p80 = scmp.ne.s32.totalorder %s71, %s72
    %p81 = scmp.eq.s32.totalorder %s19, 0
    %p82 = por %p80, %p81
    %p83 = scmp.ne.s32.totalorder %s71, %s72
    %p84 = scmp.eq.s32.totalorder %s20, 1
    %p85 = por %p83, %p84
    %p87 = scmp.ne.s32.totalorder %s72, %s86
    %p88 = scmp.eq.s32.totalorder %s20, 0
    %p89 = por %p87, %p88
    %s91 = sadd.s32 %s90, 1
    %p94 = scmp.eq.s32.totalorder %s14, 1
    %p95 = scmp.ne.s32.totalorder %s90, %s92
    %p96 = scmp.eq.s32.totalorder %s14, 0
    %p97 = por %p95, %p96
    %p98 = scmp.ne.s32.totalorder %s90, %s92
    %p99 = scmp.eq.s32.totalorder %s19, 1
    %p100 = por %p98, %p99
    %p101 = scmp.ne.s32.totalorder %s92, %s93
    %p102 = scmp.eq.s32.totalorder %s19, 0
    %p103 = por %p101, %p102
    %p104 = scmp.ne.s32.totalorder %s92, %s93
    %p105 = scmp.eq.s32.totalorder %s20, 1
    %p106 = por %p104, %p105
    %p108 = scmp.ne.s32.totalorder %s93, %s107
    %p109 = scmp.eq.s32.totalorder %s20, 0
    %p110 = por %p108, %p109
    %s112 = sadd.s32 %s111, 1
    %p115 = scmp.eq.s32.totalorder %s14, 1
    %p116 = scmp.ne.s32.totalorder %s111, %s113
    %p117 = scmp.eq.s32.totalorder %s14, 0
    %p118 = por %p116, %p117
    %p119 = scmp.ne.s32.totalorder %s111, %s113
    %p120 = scmp.eq.s32.totalorder %s19, 1
    %p121 = por %p119, %p120
    %p122 = scmp.ne.s32.totalorder %s113, %s114
    %p123 = scmp.eq.s32.totalorder %s19, 0
    %p124 = por %p122, %p123
    %p125 = scmp.ne.s32.totalorder %s113, %s114
    %p126 = scmp.eq.s32.totalorder %s20, 1
    %p127 = por %p125, %p126
    %p129 = scmp.ne.s32.totalorder %s114, %s128
    %p130 = scmp.eq.s32.totalorder %s20, 0
    %p131 = por %p129, %p130
    %s133 = sadd.s32 %s132, 1
    %p136 = scmp.eq.s32.totalorder %s14, 1
    %p137 = scmp.ne.s32.totalorder %s132, %s134
    %p138 = scmp.eq.s32.totalorder %s14, 0
    %p139 = por %p137, %p138
    %p140 = scmp.ne.s32.totalorder %s132, %s134
    %p141 = scmp.eq.s32.totalorder %s19, 1
    %p142 = por %p140, %p141
    %p143 = scmp.ne.s32.totalorder %s134, %s135
    %p144 = scmp.eq.s32.totalorder %s19, 0
    %p145 = por %p143, %p144
    %p146 = scmp.ne.s32.totalorder %s134, %s135
    %p147 = scmp.eq.s32.totalorder %s20, 1
    %p148 = por %p146, %p147
    %p150 = scmp.ne.s32.totalorder %s135, %s149
    %p151 = scmp.eq.s32.totalorder %s20, 0
    %p152 = por %p150, %p151
    %s154 = sadd.s32 %s153, 1
    %p157 = scmp.eq.s32.totalorder %s14, 1
    %p158 = scmp.ne.s32.totalorder %s153, %s155
    %p159 = scmp.eq.s32.totalorder %s14, 0
    %p160 = por %p158, %p159
    %p161 = scmp.ne.s32.totalorder %s153, %s155
    %p162 = scmp.eq.s32.totalorder %s19, 1
    %p163 = por %p161, %p162
    %p164 = scmp.ne.s32.totalorder %s155, %s156
    %p165 = scmp.eq.s32.totalorder %s19, 0
    %p166 = por %p164, %p165
    %p167 = scmp.ne.s32.totalorder %s155, %s156
    %p168 = scmp.eq.s32.totalorder %s20, 1
    %p169 = por %p167, %p168
    %p171 = scmp.ne.s32.totalorder %s156, %s170
    %p172 = scmp.eq.s32.totalorder %s20, 0
    %p173 = por %p171, %p172
    %s175 = sadd.s32 %s174, 1
    %p178 = scmp.eq.s32.totalorder %s14, 1
    %p179 = scmp.ne.s32.totalorder %s174, %s176
    %p180 = scmp.eq.s32.totalorder %s14, 0
    %p181 = por %p179, %p180
    %p182 = scmp.ne.s32.totalorder %s174, %s176
    %p183 = scmp.eq.s32.totalorder %s19, 1
    %p184 = por %p182, %p183
    %p185 = scmp.ne.s32.totalorder %s176, %s177
    %p186 = scmp.eq.s32.totalorder %s19, 0
    %p187 = por %p185, %p186
    %p188 = scmp.ne.s32.totalorder %s176, %s177
    %p189 = scmp.eq.s32.totalorder %s20, 1
    %p190 = por %p188, %p189
    %p192 = scmp.ne.s32.totalorder %s177, %s191
    %p193 = scmp.eq.s32.totalorder %s20, 0
    %p194 = por %p192, %p193
    %s195 = ssub.s32 %s14, %s21
    %p196 = scmp.eq.s32.totalorder %s195, 0
    %s198 = sadd.s32 %s197, 1
    %s199 = scalar_select %p196, %s197, %s198
    %p202 = pneg %p196
    %p203 = scmp.eq.s32.totalorder %s14, 1
    %p204 = por %p202, %p203
    %p205 = scmp.ne.s32.totalorder %s197, %s200
    %p206 = scmp.eq.s32.totalorder %s14, 0
    %p207 = por %p205, %p206
    %p208 = scmp.ne.s32.totalorder %s197, %s200
    %p209 = scmp.eq.s32.totalorder %s19, 1
    %p210 = por %p208, %p209
    %p211 = scmp.ne.s32.totalorder %s200, %s201
    %p212 = scmp.eq.s32.totalorder %s19, 0
    %p213 = por %p211, %p212
    %p214 = scmp.ne.s32.totalorder %s200, %s201
    %p215 = scmp.eq.s32.totalorder %s20, 1
    %p216 = por %p214, %p215
    %p218 = scmp.ne.s32.totalorder %s201, %s217
    %p219 = scmp.eq.s32.totalorder %s20, 0
    %p220 = por %p218, %p219
    %p221 = scmp.le.s32.totalorder 1, %s14
    %p222 = scmp.lt.s32.totalorder %s14, 3
    %p223 = pnand %p221, %p222
    %p224 = pneg %p223
    // Predicated region
    $region9: #{gcn_net_forward.2} parent=5 // pred_check
      _
    $region10: #{gcn_net_forward.2} parent=5 // pred_check_branch
      %226 = sbr.rel (%p223) target = $region12
    $region11: #{gcn_net_forward.2} parent=5 // pred_region
      %s227 = ssub.s32 %s14, 1
      // Predicated region
      $region13: #{gcn_net_forward.2} parent=11 // pred_check
        %p228 = pneg %p35
      $region14: #{gcn_net_forward.2} parent=11 // pred_check_branch
        %230 = sbr.rel (%p228) target = $region16
      $region15: #{gcn_net_forward.2} parent=11 // pred_region
        _
      $region16: #{gcn_net_forward.2} parent=11 // pred_fallthru
        _
      // Predicated region
      $region17: #{gcn_net_forward.2} parent=11 // pred_check
        %p231 = pneg %p82
      $region18: #{gcn_net_forward.2} parent=11 // pred_check_branch
        %233 = sbr.rel (%p231) target = $region20
      $region19: #{gcn_net_forward.2} parent=11 // pred_region
        _
      $region20: #{gcn_net_forward.2} parent=11 // pred_fallthru
        _
      // Predicated region
      $region21: #{gcn_net_forward.2} parent=11 // pred_check
        %p234 = pneg %p103
      $region22: #{gcn_net_forward.2} parent=11 // pred_check_branch
        %236 = sbr.rel (%p234) target = $region24
      $region23: #{gcn_net_forward.2} parent=11 // pred_region
        _
      $region24: #{gcn_net_forward.2} parent=11 // pred_fallthru
        _
      // Predicated region
      $region25: #{gcn_net_forward.2} parent=11 // pred_check
        %p237 = pneg %p124
      $region26: #{gcn_net_forward.2} parent=11 // pred_check_branch
        %239 = sbr.rel (%p237) target = $region28
      $region27: #{gcn_net_forward.2} parent=11 // pred_region
        _
      $region28: #{gcn_net_forward.2} parent=11 // pred_fallthru
        _
      // Predicated region
      $region29: #{gcn_net_forward.2} parent=11 // pred_check
        %p240 = pneg %p145
      $region30: #{gcn_net_forward.2} parent=11 // pred_check_branch
        %242 = sbr.rel (%p240) target = $region32
      $region31: #{gcn_net_forward.2} parent=11 // pred_region
        _
      $region32: #{gcn_net_forward.2} parent=11 // pred_fallthru
        _
      // Predicated region
      $region33: #{gcn_net_forward.2} parent=11 // pred_check
        %p243 = pneg %p166
      $region34: #{gcn_net_forward.2} parent=11 // pred_check_branch
        %245 = sbr.rel (%p243) target = $region36
      $region35: #{gcn_net_forward.2} parent=11 // pred_region
        _
      $region36: #{gcn_net_forward.2} parent=11 // pred_fallthru
        _
      // Predicated region
      $region37: #{gcn_net_forward.2} parent=11 // pred_check
        %p246 = pneg %p187
      $region38: #{gcn_net_forward.2} parent=11 // pred_check_branch
        %248 = sbr.rel (%p246) target = $region40
      $region39: #{gcn_net_forward.2} parent=11 // pred_region
        _
      $region40: #{gcn_net_forward.2} parent=11 // pred_fallthru
        _
    $region12: #{gcn_net_forward.2} parent=5 // pred_fallthru
      _
    %p249 = scmp.lt.s32.totalorder %s14, 2
    // Predicated region
    $region41: #{gcn_net_forward.2} parent=5 // pred_check
      %p250 = pneg %p249
    $region42: #{gcn_net_forward.2} parent=5 // pred_check_branch
      %252 = sbr.rel (%p250) target = $region44
    $region43: #{gcn_net_forward.2} parent=5 // pred_region
      // Predicated region
      $region45: #{gcn_net_forward.2} parent=43 // pred_check
        %p253 = pneg %p55
      $region46: #{gcn_net_forward.2} parent=43 // pred_check_branch
        %255 = sbr.rel (%p253) target = $region48
      $region47: #{gcn_net_forward.2} parent=43 // pred_region
        %p256 = scmp.lt.s32.totalorder %s14, 1
        %s257 = scalar_select %p256, %s14, 1
        %s258 = smul.addr %s257, 8
        %s259 = smul.addr %s258, 8
        %s260 = scalar_lea.vmem %s1, %s259
      $region48: #{gcn_net_forward.2} parent=43 // pred_fallthru
        _
    $region44: #{gcn_net_forward.2} parent=5 // pred_fallthru
      _
    %p261 = scmp.le.s32.totalorder 1, %s14
    %p262 = scmp.lt.s32.totalorder %s14, 3
    %p263 = pnand %p261, %p262
    %p264 = pneg %p263
    // Predicated region
    $region49: #{gcn_net_forward.2} parent=5 // pred_check
      _
    $region50: #{gcn_net_forward.2} parent=5 // pred_check_branch
      %266 = sbr.rel (%p263) target = $region52
    $region51: #{gcn_net_forward.2} parent=5 // pred_region
      %s267 = ssub.s32 %s14, 1
      %p268 = pneg %p35
      %p269 = pneg %p32
      %p270 = scmp.lt.s32.totalorder %s19, 1
      %s271 = scalar_select %p270, %s19, 1
      %s272 = smul.addr %s271, 8
      %s273 = smul.addr %s272, 8
      %s274 = scalar_lea.vmem %s1, %s273
      %p275 = pneg %p61
      %p276 = pneg %p58
      %p277 = pneg %p82
      %p278 = pneg %p79
      %p279 = pneg %p103
      %p280 = pneg %p100
      %p281 = pneg %p124
      %p282 = pneg %p121
      %p283 = pneg %p145
      %p284 = pneg %p142
      %p285 = pneg %p166
      %p286 = pneg %p163
      %p287 = pneg %p187
      %p288 = pneg %p184
      %p289 = pneg %p213
      %p290 = pneg %p210
      %p291 = scmp.lt.s32.totalorder %s19, 1
      %s292 = scalar_select %p291, %s19, 1
      %s293 = smul.addr %s292, 8
      %s294 = smul.addr %s293, 8
      %s295 = scalar_lea.vmem %s8, %s294
      %p296 = scmp.lt.s32.totalorder %s19, 1
      %s297 = scalar_select %p296, %s19, 1
      %s298 = smul.addr %s297, 8
      %s299 = smul.addr %s298, 8
      %s300 = scalar_lea.vmem %s1, %s299
      %p301 = scmp.lt.s32.totalorder %s19, 1
      %s302 = scalar_select %p301, %s19, 1
      %s303 = smul.addr %s302, 8
      %s304 = smul.addr %s303, 8
      %s305 = scalar_lea.vmem %s8, %s304
      %v307 = vld [vmem:[%s0] sm:$0xf]
      %v308 = vld [vmem:[%s0 + $0x4] sm:$0xf]
      %v309 = vld [vmem:[%s0 + $0x8] sm:$0xf]
      %v310 = vld [vmem:[%s0 + $0xc] sm:$0xf]
      %v311 = vld [vmem:[%s0 + $0x10] sm:$0xf]
      %v312 = vld [vmem:[%s0 + $0x14] sm:$0xf]
      %v313 = vld [vmem:[%s0 + $0x18] sm:$0xf]
      %v314 = vld [vmem:[%s0 + $0x1c] sm:$0xf]
      %v315 = vld [vmem:[%s300] sm:$0xff]
      %v316 = vld [vmem:[%s300 + $0x8] sm:$0xff]
      %v317 = vld [vmem:[%s300 + $0x10] sm:$0xff]
      %v318 = vld [vmem:[%s300 + $0x18] sm:$0xff]
      %v319 = vld [vmem:[%s300 + $0x20] sm:$0xff]
      %v320 = vld [vmem:[%s300 + $0x28] sm:$0xff]
      %v321 = vld [vmem:[%s300 + $0x30] sm:$0xff]
      %v322 = vld [vmem:[%s300 + $0x38] sm:$0xff]
      %v323 = vld [vmem:[%s2] sm:$0x1f]
      %vm324 = vcmask 39936
      %v326 = vsel %vm324, %v315, 0
      %v329 = vsel %vm324, %v316, 0
      %v332 = vsel %vm324, %v317, 0
      %v335 = vsel %vm324, %v318, 0
      %v338 = vsel %vm324, %v319, 0
      %v341 = vsel %vm324, %v320, 0
      %v344 = vsel %vm324, %v321, 0
      %v347 = vsel %vm324, %v322, 0
      %vm349 = vcmask 1044480
      %v351 = vsel %vm349, %v323, 0
      %353 = vmatprep.subr.mxu0 0.0
      %354 = vmatpush1.msra.mxu0 %v351
      %355 = vmatprep.subr.mxu0 0.0
      %356 = vmatpush1.msra.mxu0 0.0
      %357 = vmatprep.subr.mxu0 0.0
      %358 = vmatpush1.msra.mxu0 0.0
      %359 = vmatprep.subr.mxu0 0.0
      %360 = vmatpush1.msra.mxu0 0.0
      %361 = vmatprep.subr.mxu0 0.0
      %362 = vmatpush1.msra.mxu0 0.0
      %363 = vmatprep.subr.mxu0 0.0
      %364 = vmatpush1.msra.mxu0 0.0
      %365 = vmatprep.subr.mxu0 0.0
      %366 = vmatpush1.msra.mxu0 0.0
      %367 = vmatprep.subr.mxu0 0.0
      %368 = vmatpush1.msra.mxu0 0.0
      %369 = vmatprep.subr.mxu0 0.0
      %370 = vmatpush1.msra.mxu0 0.0
      %371 = vmatprep.subr.mxu0 0.0
      %372 = vmatpush1.msra.mxu0 0.0
      %373 = vmatprep.subr.mxu0 0.0
      %374 = vmatpush1.msra.mxu0 0.0
      %375 = vmatprep.subr.mxu0 0.0
      %376 = vmatpush1.msra.mxu0 0.0
      %377 = vmatprep.subr.mxu0 0.0
      %378 = vmatpush1.msra.mxu0 0.0
      %379 = vmatprep.subr.mxu0 0.0
      %380 = vmatpush1.msra.mxu0 0.0
      %381 = vmatprep.subr.mxu0 0.0
      %382 = vmatpush1.msra.mxu0 0.0
      %383 = vmatprep.subr.mxu0 0.0
      %384 = vmatpush1.msra.mxu0 0.0
      %385 = vmatprep.subr.mxu0 0.0
      %386 = vmatpush1.msra.mxu0 0.0
      %387 = vmatprep.subr.mxu0 0.0
      %388 = vmatpush1.msra.mxu0 0.0
      %389 = vmatprep.subr.mxu0 0.0
      %390 = vmatpush1.msra.mxu0 0.0
      %391 = vmatprep.subr.mxu0 0.0
      %392 = vmatpush1.msra.mxu0 0.0
      %393 = vmatprep.subr.mxu0 0.0
      %394 = vmatpush1.msra.mxu0 0.0
      %395 = vmatprep.subr.mxu0 0.0
      %396 = vmatpush1.msra.mxu0 0.0
      %397 = vmatprep.subr.mxu0 0.0
      %398 = vmatpush1.msra.mxu0 0.0
      %399 = vmatprep.subr.mxu0 0.0
      %400 = vmatpush1.msra.mxu0 0.0
      %401 = vmatprep.subr.mxu0 0.0
      %402 = vmatpush1.msra.mxu0 0.0
      %403 = vmatprep.subr.mxu0 0.0
      %404 = vmatpush1.msra.mxu0 0.0
      %405 = vmatprep.subr.mxu0 0.0
      %406 = vmatpush1.msra.mxu0 0.0
      %407 = vmatprep.subr.mxu0 0.0
      %408 = vmatpush1.msra.mxu0 0.0
      %409 = vmatprep.subr.mxu0 0.0
      %410 = vmatpush1.msra.mxu0 0.0
      %411 = vmatprep.subr.mxu0 0.0
      %412 = vmatpush1.msra.mxu0 0.0
      %413 = vmatprep.subr.mxu0 0.0
      %414 = vmatpush1.msra.mxu0 0.0
      %415 = vmatprep.subr.mxu0 0.0
      %416 = vmatpush1.msra.mxu0 0.0
      %417 = vmatprep.mubr.f32.mxu0 0.0
      %418 = vmatmul.mubr.f32.gmra.mrb[0].mxu0 %v326
      %v419 = vpop.f32.mrb[0].mxu0
      %v420 = vadd.f32 0.0, %v419
      %v421 = vpop.f32.mrb[0].mxu0
      %422 = vmatprep.mubr.f32.mxu0 0.0
      %423 = vmatmul.mubr.f32.gmra.mrb[0].mxu0 %v329
      %v424 = vpop.f32.mrb[0].mxu0
      %v425 = vadd.f32 0.0, %v424
      %v426 = vpop.f32.mrb[0].mxu0
      %427 = vmatprep.mubr.f32.mxu0 0.0
      %428 = vmatmul.mubr.f32.gmra.mrb[0].mxu0 %v332
      %v429 = vpop.f32.mrb[0].mxu0
      %v430 = vadd.f32 0.0, %v429
      %v431 = vpop.f32.mrb[0].mxu0
      %432 = vmatprep.mubr.f32.mxu0 0.0
      %433 = vmatmul.mubr.f32.gmra.mrb[0].mxu0 %v335
      %v434 = vpop.f32.mrb[0].mxu0
      %v435 = vadd.f32 0.0, %v434
      %v436 = vpop.f32.mrb[0].mxu0
      %437 = vmatprep.mubr.f32.mxu0 0.0
      %438 = vmatmul.mubr.f32.gmra.mrb[0].mxu0 %v338
      %v439 = vpop.f32.mrb[0].mxu0
      %v440 = vadd.f32 0.0, %v439
      %v441 = vpop.f32.mrb[0].mxu0
      %442 = vmatprep.mubr.f32.mxu0 0.0
      %443 = vmatmul.mubr.f32.gmra.mrb[0].mxu0 %v341
      %v444 = vpop.f32.mrb[0].mxu0
      %v445 = vadd.f32 0.0, %v444
      %v446 = vpop.f32.mrb[0].mxu0
      %447 = vmatprep.mubr.f32.mxu0 0.0
      %448 = vmatmul.mubr.f32.gmra.mrb[0].mxu0 %v344
      %v449 = vpop.f32.mrb[0].mxu0
      %v450 = vadd.f32 0.0, %v449
      %v451 = vpop.f32.mrb[0].mxu0
      %452 = vmatprep.mubr.f32.mxu0 0.0
      %453 = vmatmul.mubr.f32.gmra.mrb[0].mxu0 %v347
      %v454 = vpop.f32.mrb[0].mxu0
      %v455 = vadd.f32 0.0, %v454
      %v456 = vpop.f32.mrb[0].mxu0
      %457 = vdwg.mxu0
      %v458 = vpack.c.bf16 %v425, %v420
      %v459 = vpack.c.bf16 %v435, %v430
      %v460 = vpack.c.bf16 %v445, %v440
      %v461 = vpack.c.bf16 %v455, %v450
      %v462 = vld [vmem:[%s3] sm:$0x1]
      %v464 = vlaneseq
      %v465 = vshrl.u32 %v464, 7
      %v466 = vsub.s32 0, %v465
      %v467 = vrot.slane %v462, %v466
      %v477 = vunpack.c.l.b16 %v307
      %v478 = vunpack.c.l.b16 %v308
      %v479 = vunpack.c.l.b16 %v309
      %v480 = vunpack.c.l.b16 %v310
      %v481 = vunpack.c.l.b16 %v311
      %v482 = vunpack.c.l.b16 %v312
      %v483 = vunpack.c.l.b16 %v313
      %v484 = vunpack.c.l.b16 %v314
      %v485 = vpack.c.b16 %v478, %v477
      %v486 = vpack.c.b16 %v480, %v479
      %v487 = vpack.c.b16 %v482, %v481
      %v488 = vpack.c.b16 %v484, %v483
      %vm489 = vcmask 523264
      %v491 = vsel %vm489, %v485, 0
      %v494 = vsel %vm489, %v486, 0
      %v497 = vsel %vm489, %v487, 0
      %v500 = vsel %vm489, %v488, 0
      %502 = vmatprep.subr.bf16.mxu0 0
      %503 = vmatpush1.bf16.msra.mxu0 %v458
      %504 = vmatprep.subr.bf16.mxu0 0
      %505 = vmatpush1.bf16.msra.mxu0 %v459
      %506 = vmatprep.subr.bf16.mxu0 0
      %507 = vmatpush1.bf16.msra.mxu0 %v460
      %508 = vmatprep.subr.bf16.mxu0 0
      %509 = vmatpush1.bf16.msra.mxu0 %v461
      %510 = vmatprep.subr.bf16.mxu0 0
      %511 = vmatpush1.bf16.msra.mxu0 0
      %512 = vmatprep.subr.bf16.mxu0 0
      %513 = vmatpush1.bf16.msra.mxu0 0
      %514 = vmatprep.subr.bf16.mxu0 0
      %515 = vmatpush1.bf16.msra.mxu0 0
      %516 = vmatprep.subr.bf16.mxu0 0
      %517 = vmatpush1.bf16.msra.mxu0 0
      %518 = vmatprep.subr.bf16.mxu0 0
      %519 = vmatpush1.bf16.msra.mxu0 0
      %520 = vmatprep.subr.bf16.mxu0 0
      %521 = vmatpush1.bf16.msra.mxu0 0
      %522 = vmatprep.subr.bf16.mxu0 0
      %523 = vmatpush1.bf16.msra.mxu0 0
      %524 = vmatprep.subr.bf16.mxu0 0
      %525 = vmatpush1.bf16.msra.mxu0 0
      %526 = vmatprep.subr.bf16.mxu0 0
      %527 = vmatpush1.bf16.msra.mxu0 0
      %528 = vmatprep.subr.bf16.mxu0 0
      %529 = vmatpush1.bf16.msra.mxu0 0
      %530 = vmatprep.subr.bf16.mxu0 0
      %531 = vmatpush1.bf16.msra.mxu0 0
      %532 = vmatprep.subr.bf16.mxu0 0
      %533 = vmatpush1.bf16.msra.mxu0 0
      %534 = vmatprep.mubr.bf16.mxu0 0
      %535 = vmatmul.mubr.bf16.gmra.mrb[0].mxu0 %v491
      %v536 = vpop.f32.mrb[0].mxu0
      %v537 = vadd.f32 %v467, %v536
      %v538 = vpop.f32.mrb[0].mxu0
      %v539 = vpop.f32.mrb[0].mxu0
      %v540 = vadd.f32 %v467, %v539
      %v541 = vpop.f32.mrb[0].mxu0
      %542 = vmatprep.mubr.bf16.mxu0 0
      %543 = vmatmul.mubr.bf16.gmra.mrb[0].mxu0 %v494
      %v544 = vpop.f32.mrb[0].mxu0
      %v545 = vadd.f32 %v467, %v544
      %v546 = vpop.f32.mrb[0].mxu0
      %v547 = vpop.f32.mrb[0].mxu0
      %v548 = vadd.f32 %v467, %v547
      %v549 = vpop.f32.mrb[0].mxu0
      %550 = vmatprep.mubr.bf16.mxu0 0
      %551 = vmatmul.mubr.bf16.gmra.mrb[0].mxu0 %v497
      %v552 = vpop.f32.mrb[0].mxu0
      %v553 = vadd.f32 %v467, %v552
      %v554 = vpop.f32.mrb[0].mxu0
      %v555 = vpop.f32.mrb[0].mxu0
      %v556 = vadd.f32 %v467, %v555
      %v557 = vpop.f32.mrb[0].mxu0
      %558 = vmatprep.mubr.bf16.mxu0 0
      %559 = vmatmul.mubr.bf16.gmra.mrb[0].mxu0 %v500
      %v560 = vpop.f32.mrb[0].mxu0
      %v561 = vadd.f32 %v467, %v560
      %v562 = vpop.f32.mrb[0].mxu0
      %v563 = vpop.f32.mrb[0].mxu0
      %v564 = vadd.f32 %v467, %v563
      %v565 = vpop.f32.mrb[0].mxu0
      %566 = vdwg.mxu0
      %v567 = vmax.f32 %v537, 0.0
      %v568 = vmax.f32 %v540, 0.0
      %v569 = vmax.f32 %v545, 0.0
      %v570 = vmax.f32 %v548, 0.0
      %v571 = vmax.f32 %v553, 0.0
      %v572 = vmax.f32 %v556, 0.0
      %v573 = vmax.f32 %v561, 0.0
      %v574 = vmax.f32 %v564, 0.0
      %v575 = vld [vmem:[%s4] sm:$0xff]
      %v576 = vld [vmem:[%s4 + $0x8] sm:$0xff]
      %v577 = vld [vmem:[%s4 + $0x10] sm:$0xff]
      %v578 = vld [vmem:[%s4 + $0x18] sm:$0xff]
      %vm579 = vcmask 261120
      %v581 = vsel %vm579, %v567, 0
      %v584 = vsel %vm579, %v568, 0
      %v587 = vsel %vm579, %v569, 0
      %v590 = vsel %vm579, %v570, 0
      %v593 = vsel %vm579, %v571, 0
      %v596 = vsel %vm579, %v572, 0
      %v599 = vsel %vm579, %v573, 0
      %v602 = vsel %vm579, %v574, 0
      %604 = vmatprep.subr.mxu0 0.0
      %605 = vmatpush1.msra.mxu0 %v575
      %606 = vmatprep.subr.mxu0 0.0
      %607 = vmatpush1.msra.mxu0 %v576
      %608 = vmatprep.subr.mxu0 0.0
      %609 = vmatpush1.msra.mxu0 %v577
      %610 = vmatprep.subr.mxu0 0.0
      %611 = vmatpush1.msra.mxu0 %v578
      %612 = vmatprep.subr.mxu0 0.0
      %613 = vmatpush1.msra.mxu0 0.0
      %614 = vmatprep.subr.mxu0 0.0
      %615 = vmatpush1.msra.mxu0 0.0
      %616 = vmatprep.subr.mxu0 0.0
      %617 = vmatpush1.msra.mxu0 0.0
      %618 = vmatprep.subr.mxu0 0.0
      %619 = vmatpush1.msra.mxu0 0.0
      %620 = vmatprep.subr.mxu0 0.0
      %621 = vmatpush1.msra.mxu0 0.0
      %622 = vmatprep.subr.mxu0 0.0
      %623 = vmatpush1.msra.mxu0 0.0
      %624 = vmatprep.subr.mxu0 0.0
      %625 = vmatpush1.msra.mxu0 0.0
      %626 = vmatprep.subr.mxu0 0.0
      %627 = vmatpush1.msra.mxu0 0.0
      %628 = vmatprep.subr.mxu0 0.0
      %629 = vmatpush1.msra.mxu0 0.0
      %630 = vmatprep.subr.mxu0 0.0
      %631 = vmatpush1.msra.mxu0 0.0
      %632 = vmatprep.subr.mxu0 0.0
      %633 = vmatpush1.msra.mxu0 0.0
      %634 = vmatprep.subr.mxu0 0.0
      %635 = vmatpush1.msra.mxu0 0.0
      %636 = vmatprep.subr.mxu0 0.0
      %637 = vmatpush1.msra.mxu0 0.0
      %638 = vmatprep.subr.mxu0 0.0
      %639 = vmatpush1.msra.mxu0 0.0
      %640 = vmatprep.subr.mxu0 0.0
      %641 = vmatpush1.msra.mxu0 0.0
      %642 = vmatprep.subr.mxu0 0.0
      %643 = vmatpush1.msra.mxu0 0.0
      %644 = vmatprep.subr.mxu0 0.0
      %645 = vmatpush1.msra.mxu0 0.0
      %646 = vmatprep.subr.mxu0 0.0
      %647 = vmatpush1.msra.mxu0 0.0
      %648 = vmatprep.subr.mxu0 0.0
      %649 = vmatpush1.msra.mxu0 0.0
      %650 = vmatprep.subr.mxu0 0.0
      %651 = vmatpush1.msra.mxu0 0.0
      %652 = vmatprep.subr.mxu0 0.0
      %653 = vmatpush1.msra.mxu0 0.0
      %654 = vmatprep.subr.mxu0 0.0
      %655 = vmatpush1.msra.mxu0 0.0
      %656 = vmatprep.subr.mxu0 0.0
      %657 = vmatpush1.msra.mxu0 0.0
      %658 = vmatprep.subr.mxu0 0.0
      %659 = vmatpush1.msra.mxu0 0.0
      %660 = vmatprep.subr.mxu0 0.0
      %661 = vmatpush1.msra.mxu0 0.0
      %662 = vmatprep.subr.mxu0 0.0
      %663 = vmatpush1.msra.mxu0 0.0
      %664 = vmatprep.subr.mxu0 0.0
      %665 = vmatpush1.msra.mxu0 0.0
      %666 = vmatprep.subr.mxu0 0.0
      %667 = vmatpush1.msra.mxu0 0.0
      %668 = vmatprep.mubr.f32.mxu0 0.0
      %669 = vmatmul.mubr.f32.gmra.mrb[0].mxu0 %v581
      %v670 = vpop.f32.mrb[0].mxu0
      %v671 = vadd.f32 0.0, %v670
      %v672 = vpop.f32.mrb[0].mxu0
      %673 = vmatprep.mubr.f32.mxu0 0.0
      %674 = vmatmul.mubr.f32.gmra.mrb[0].mxu0 %v584
      %v675 = vpop.f32.mrb[0].mxu0
      %v676 = vadd.f32 0.0, %v675
      %v677 = vpop.f32.mrb[0].mxu0
      %678 = vmatprep.mubr.f32.mxu0 0.0
      %679 = vmatmul.mubr.f32.gmra.mrb[0].mxu0 %v587
      %v680 = vpop.f32.mrb[0].mxu0
      %v681 = vadd.f32 0.0, %v680
      %v682 = vpop.f32.mrb[0].mxu0
      %683 = vmatprep.mubr.f32.mxu0 0.0
      %684 = vmatmul.mubr.f32.gmra.mrb[0].mxu0 %v590
      %v685 = vpop.f32.mrb[0].mxu0
      %v686 = vadd.f32 0.0, %v685
      %v687 = vpop.f32.mrb[0].mxu0
      %688 = vmatprep.mubr.f32.mxu0 0.0
      %689 = vmatmul.mubr.f32.gmra.mrb[0].mxu0 %v593
      %v690 = vpop.f32.mrb[0].mxu0
      %v691 = vadd.f32 0.0, %v690
      %v692 = vpop.f32.mrb[0].mxu0
      %693 = vmatprep.mubr.f32.mxu0 0.0
      %694 = vmatmul.mubr.f32.gmra.mrb[0].mxu0 %v596
      %v695 = vpop.f32.mrb[0].mxu0
      %v696 = vadd.f32 0.0, %v695
      %v697 = vpop.f32.mrb[0].mxu0
      %698 = vmatprep.mubr.f32.mxu0 0.0
      %699 = vmatmul.mubr.f32.gmra.mrb[0].mxu0 %v599
      %v700 = vpop.f32.mrb[0].mxu0
      %v701 = vadd.f32 0.0, %v700
      %v702 = vpop.f32.mrb[0].mxu0
      %703 = vmatprep.mubr.f32.mxu0 0.0
      %704 = vmatmul.mubr.f32.gmra.mrb[0].mxu0 %v602
      %v705 = vpop.f32.mrb[0].mxu0
      %v706 = vadd.f32 0.0, %v705
      %v707 = vpop.f32.mrb[0].mxu0
      %708 = vdwg.mxu0
      %v709 = vpack.c.bf16 %v676, %v671
      %v710 = vpack.c.bf16 %v686, %v681
      %v711 = vpack.c.bf16 %v696, %v691
      %v712 = vpack.c.bf16 %v706, %v701
      %v713 = vld [vmem:[%s5] sm:$0x1]
      %v715 = vlaneseq
      %v716 = vshrl.u32 %v715, 7
      %v717 = vsub.s32 0, %v716
      %v718 = vrot.slane %v713, %v717
      %720 = vmatprep.subr.bf16.mxu0 0
      %721 = vmatpush1.bf16.msra.mxu0 %v709
      %722 = vmatprep.subr.bf16.mxu0 0
      %723 = vmatpush1.bf16.msra.mxu0 %v710
      %724 = vmatprep.subr.bf16.mxu0 0
      %725 = vmatpush1.bf16.msra.mxu0 %v711
      %726 = vmatprep.subr.bf16.mxu0 0
      %727 = vmatpush1.bf16.msra.mxu0 %v712
      %728 = vmatprep.subr.bf16.mxu0 0
      %729 = vmatpush1.bf16.msra.mxu0 0
      %730 = vmatprep.subr.bf16.mxu0 0
      %731 = vmatpush1.bf16.msra.mxu0 0
      %732 = vmatprep.subr.bf16.mxu0 0
      %733 = vmatpush1.bf16.msra.mxu0 0
      %734 = vmatprep.subr.bf16.mxu0 0
      %735 = vmatpush1.bf16.msra.mxu0 0
      %736 = vmatprep.subr.bf16.mxu0 0
      %737 = vmatpush1.bf16.msra.mxu0 0
      %738 = vmatprep.subr.bf16.mxu0 0
      %739 = vmatpush1.bf16.msra.mxu0 0
      %740 = vmatprep.subr.bf16.mxu0 0
      %741 = vmatpush1.bf16.msra.mxu0 0
      %742 = vmatprep.subr.bf16.mxu0 0
      %743 = vmatpush1.bf16.msra.mxu0 0
      %744 = vmatprep.subr.bf16.mxu0 0
      %745 = vmatpush1.bf16.msra.mxu0 0
      %746 = vmatprep.subr.bf16.mxu0 0
      %747 = vmatpush1.bf16.msra.mxu0 0
      %748 = vmatprep.subr.bf16.mxu0 0
      %749 = vmatpush1.bf16.msra.mxu0 0
      %750 = vmatprep.subr.bf16.mxu0 0
      %751 = vmatpush1.bf16.msra.mxu0 0
      %752 = vmatprep.mubr.bf16.mxu0 0
      %753 = vmatmul.mubr.bf16.gmra.mrb[0].mxu0 %v491
      %v754 = vpop.f32.mrb[0].mxu0
      %v755 = vadd.f32 %v718, %v754
      %v756 = vpop.f32.mrb[0].mxu0
      %v757 = vpop.f32.mrb[0].mxu0
      %v758 = vadd.f32 %v718, %v757
      %v759 = vpop.f32.mrb[0].mxu0
      %760 = vmatprep.mubr.bf16.mxu0 0
      %761 = vmatmul.mubr.bf16.gmra.mrb[0].mxu0 %v494
      %v762 = vpop.f32.mrb[0].mxu0
      %v763 = vadd.f32 %v718, %v762
      %v764 = vpop.f32.mrb[0].mxu0
      %v765 = vpop.f32.mrb[0].mxu0
      %v766 = vadd.f32 %v718, %v765
      %v767 = vpop.f32.mrb[0].mxu0
      %768 = vmatprep.mubr.bf16.mxu0 0
      %769 = vmatmul.mubr.bf16.gmra.mrb[0].mxu0 %v497
      %v770 = vpop.f32.mrb[0].mxu0
      %v771 = vadd.f32 %v718, %v770
      %v772 = vpop.f32.mrb[0].mxu0
      %v773 = vpop.f32.mrb[0].mxu0
      %v774 = vadd.f32 %v718, %v773
      %v775 = vpop.f32.mrb[0].mxu0
      %776 = vmatprep.mubr.bf16.mxu0 0
      %777 = vmatmul.mubr.bf16.gmra.mrb[0].mxu0 %v500
      %v778 = vpop.f32.mrb[0].mxu0
      %v779 = vadd.f32 %v718, %v778
      %v780 = vpop.f32.mrb[0].mxu0
      %v781 = vpop.f32.mrb[0].mxu0
      %v782 = vadd.f32 %v718, %v781
      %v783 = vpop.f32.mrb[0].mxu0
      %784 = vdwg.mxu0
      %v785 = vmax.f32 %v755, 0.0
      %v786 = vmax.f32 %v758, 0.0
      %v787 = vmax.f32 %v763, 0.0
      %v788 = vmax.f32 %v766, 0.0
      %v789 = vmax.f32 %v771, 0.0
      %v790 = vmax.f32 %v774, 0.0
      %v791 = vmax.f32 %v779, 0.0
      %v792 = vmax.f32 %v782, 0.0
      %v793 = vld [vmem:[%s6] sm:$0xff]
      %v794 = vld [vmem:[%s6 + $0x8] sm:$0xff]
      %vm795 = vcmask 130048
      %v797 = vsel %vm795, %v785, 0
      %v800 = vsel %vm795, %v786, 0
      %v803 = vsel %vm795, %v787, 0
      %v806 = vsel %vm795, %v788, 0
      %v809 = vsel %vm795, %v789, 0
      %v812 = vsel %vm795, %v790, 0
      %v815 = vsel %vm795, %v791, 0
      %v818 = vsel %vm795, %v792, 0
      %820 = vmatprep.subr.mxu0 0.0
      %821 = vmatpush1.msra.mxu0 %v793
      %822 = vmatprep.subr.mxu0 0.0
      %823 = vmatpush1.msra.mxu0 %v794
      %824 = vmatprep.subr.mxu0 0.0
      %825 = vmatpush1.msra.mxu0 0.0
      %826 = vmatprep.subr.mxu0 0.0
      %827 = vmatpush1.msra.mxu0 0.0
      %828 = vmatprep.subr.mxu0 0.0
      %829 = vmatpush1.msra.mxu0 0.0
      %830 = vmatprep.subr.mxu0 0.0
      %831 = vmatpush1.msra.mxu0 0.0
      %832 = vmatprep.subr.mxu0 0.0
      %833 = vmatpush1.msra.mxu0 0.0
      %834 = vmatprep.subr.mxu0 0.0
      %835 = vmatpush1.msra.mxu0 0.0
      %836 = vmatprep.subr.mxu0 0.0
      %837 = vmatpush1.msra.mxu0 0.0
      %838 = vmatprep.subr.mxu0 0.0
      %839 = vmatpush1.msra.mxu0 0.0
      %840 = vmatprep.subr.mxu0 0.0
      %841 = vmatpush1.msra.mxu0 0.0
      %842 = vmatprep.subr.mxu0 0.0
      %843 = vmatpush1.msra.mxu0 0.0
      %844 = vmatprep.subr.mxu0 0.0
      %845 = vmatpush1.msra.mxu0 0.0
      %846 = vmatprep.subr.mxu0 0.0
      %847 = vmatpush1.msra.mxu0 0.0
      %848 = vmatprep.subr.mxu0 0.0
      %849 = vmatpush1.msra.mxu0 0.0
      %850 = vmatprep.subr.mxu0 0.0
      %851 = vmatpush1.msra.mxu0 0.0
      %852 = vmatprep.subr.mxu0 0.0
      %853 = vmatpush1.msra.mxu0 0.0
      %854 = vmatprep.subr.mxu0 0.0
      %855 = vmatpush1.msra.mxu0 0.0
      %856 = vmatprep.subr.mxu0 0.0
      %857 = vmatpush1.msra.mxu0 0.0
      %858 = vmatprep.subr.mxu0 0.0
      %859 = vmatpush1.msra.mxu0 0.0
      %860 = vmatprep.subr.mxu0 0.0
      %861 = vmatpush1.msra.mxu0 0.0
      %862 = vmatprep.subr.mxu0 0.0
      %863 = vmatpush1.msra.mxu0 0.0
      %864 = vmatprep.subr.mxu0 0.0
      %865 = vmatpush1.msra.mxu0 0.0
      %866 = vmatprep.subr.mxu0 0.0
      %867 = vmatpush1.msra.mxu0 0.0
      %868 = vmatprep.subr.mxu0 0.0
      %869 = vmatpush1.msra.mxu0 0.0
      %870 = vmatprep.subr.mxu0 0.0
      %871 = vmatpush1.msra.mxu0 0.0
      %872 = vmatprep.subr.mxu0 0.0
      %873 = vmatpush1.msra.mxu0 0.0
      %874 = vmatprep.subr.mxu0 0.0
      %875 = vmatpush1.msra.mxu0 0.0
      %876 = vmatprep.subr.mxu0 0.0
      %877 = vmatpush1.msra.mxu0 0.0
      %878 = vmatprep.subr.mxu0 0.0
      %879 = vmatpush1.msra.mxu0 0.0
      %880 = vmatprep.subr.mxu0 0.0
      %881 = vmatpush1.msra.mxu0 0.0
      %882 = vmatprep.subr.mxu0 0.0
      %883 = vmatpush1.msra.mxu0 0.0
      %884 = vmatprep.mubr.f32.mxu0 0.0
      %885 = vmatmul.mubr.f32.gmra.mrb[0].mxu0 %v797
      %v886 = vpop.f32.mrb[0].mxu0
      %v887 = vadd.f32 0.0, %v886
      %v888 = vpop.f32.mrb[0].mxu0
      %889 = vmatprep.mubr.f32.mxu0 0.0
      %890 = vmatmul.mubr.f32.gmra.mrb[0].mxu0 %v800
      %v891 = vpop.f32.mrb[0].mxu0
      %v892 = vadd.f32 0.0, %v891
      %v893 = vpop.f32.mrb[0].mxu0
      %894 = vmatprep.mubr.f32.mxu0 0.0
      %895 = vmatmul.mubr.f32.gmra.mrb[0].mxu0 %v803
      %v896 = vpop.f32.mrb[0].mxu0
      %v897 = vadd.f32 0.0, %v896
      %v898 = vpop.f32.mrb[0].mxu0
      %899 = vmatprep.mubr.f32.mxu0 0.0
      %900 = vmatmul.mubr.f32.gmra.mrb[0].mxu0 %v806
      %v901 = vpop.f32.mrb[0].mxu0
      %v902 = vadd.f32 0.0, %v901
      %v903 = vpop.f32.mrb[0].mxu0
      %904 = vmatprep.mubr.f32.mxu0 0.0
      %905 = vmatmul.mubr.f32.gmra.mrb[0].mxu0 %v809
      %v906 = vpop.f32.mrb[0].mxu0
      %v907 = vadd.f32 0.0, %v906
      %v908 = vpop.f32.mrb[0].mxu0
      %909 = vmatprep.mubr.f32.mxu0 0.0
      %910 = vmatmul.mubr.f32.gmra.mrb[0].mxu0 %v812
      %v911 = vpop.f32.mrb[0].mxu0
      %v912 = vadd.f32 0.0, %v911
      %v913 = vpop.f32.mrb[0].mxu0
      %914 = vmatprep.mubr.f32.mxu0 0.0
      %915 = vmatmul.mubr.f32.gmra.mrb[0].mxu0 %v815
      %v916 = vpop.f32.mrb[0].mxu0
      %v917 = vadd.f32 0.0, %v916
      %v918 = vpop.f32.mrb[0].mxu0
      %919 = vmatprep.mubr.f32.mxu0 0.0
      %920 = vmatmul.mubr.f32.gmra.mrb[0].mxu0 %v818
      %v921 = vpop.f32.mrb[0].mxu0
      %v922 = vadd.f32 0.0, %v921
      %v923 = vpop.f32.mrb[0].mxu0
      %924 = vdwg.mxu0
      %v925 = vpack.c.bf16 %v892, %v887
      %v926 = vpack.c.bf16 %v902, %v897
      %v927 = vpack.c.bf16 %v912, %v907
      %v928 = vpack.c.bf16 %v922, %v917
      %v929 = vld [vmem:[%s7] sm:$0x1]
      %v931 = vlaneseq
      %v932 = vshrl.u32 %v931, 7
      %v933 = vsub.s32 0, %v932
      %v934 = vrot.slane %v929, %v933
      %936 = vmatprep.subr.bf16.mxu0 0
      %937 = vmatpush1.bf16.msra.mxu0 %v925
      %938 = vmatprep.subr.bf16.mxu0 0
      %939 = vmatpush1.bf16.msra.mxu0 %v926
      %940 = vmatprep.subr.bf16.mxu0 0
      %941 = vmatpush1.bf16.msra.mxu0 %v927
      %942 = vmatprep.subr.bf16.mxu0 0
      %943 = vmatpush1.bf16.msra.mxu0 %v928
      %944 = vmatprep.subr.bf16.mxu0 0
      %945 = vmatpush1.bf16.msra.mxu0 0
      %946 = vmatprep.subr.bf16.mxu0 0
      %947 = vmatpush1.bf16.msra.mxu0 0
      %948 = vmatprep.subr.bf16.mxu0 0
      %949 = vmatpush1.bf16.msra.mxu0 0
      %950 = vmatprep.subr.bf16.mxu0 0
      %951 = vmatpush1.bf16.msra.mxu0 0
      %952 = vmatprep.subr.bf16.mxu0 0
      %953 = vmatpush1.bf16.msra.mxu0 0
      %954 = vmatprep.subr.bf16.mxu0 0
      %955 = vmatpush1.bf16.msra.mxu0 0
      %956 = vmatprep.subr.bf16.mxu0 0
      %957 = vmatpush1.bf16.msra.mxu0 0
      %958 = vmatprep.subr.bf16.mxu0 0
      %959 = vmatpush1.bf16.msra.mxu0 0
      %960 = vmatprep.subr.bf16.mxu0 0
      %961 = vmatpush1.bf16.msra.mxu0 0
      %962 = vmatprep.subr.bf16.mxu0 0
      %963 = vmatpush1.bf16.msra.mxu0 0
      %964 = vmatprep.subr.bf16.mxu0 0
      %965 = vmatpush1.bf16.msra.mxu0 0
      %966 = vmatprep.subr.bf16.mxu0 0
      %967 = vmatpush1.bf16.msra.mxu0 0
      %968 = vmatprep.mubr.bf16.mxu0 0
      %969 = vmatmul.mubr.bf16.gmra.mrb[0].mxu0 %v491
      %v970 = vpop.f32.mrb[0].mxu0
      %v971 = vadd.f32 %v934, %v970
      %v972 = vpop.f32.mrb[0].mxu0
      %v973 = vpop.f32.mrb[0].mxu0
      %v974 = vadd.f32 %v934, %v973
      %v975 = vpop.f32.mrb[0].mxu0
      %976 = vmatprep.mubr.bf16.mxu0 0
      %977 = vmatmul.mubr.bf16.gmra.mrb[0].mxu0 %v494
      %v978 = vpop.f32.mrb[0].mxu0
      %v979 = vadd.f32 %v934, %v978
      %v980 = vpop.f32.mrb[0].mxu0
      %v981 = vpop.f32.mrb[0].mxu0
      %v982 = vadd.f32 %v934, %v981
      %v983 = vpop.f32.mrb[0].mxu0
      %984 = vmatprep.mubr.bf16.mxu0 0
      %985 = vmatmul.mubr.bf16.gmra.mrb[0].mxu0 %v497
      %v986 = vpop.f32.mrb[0].mxu0
      %v987 = vadd.f32 %v934, %v986
      %v988 = vpop.f32.mrb[0].mxu0
      %v989 = vpop.f32.mrb[0].mxu0
      %v990 = vadd.f32 %v934, %v989
      %v991 = vpop.f32.mrb[0].mxu0
      %992 = vmatprep.mubr.bf16.mxu0 0
      %993 = vmatmul.mubr.bf16.gmra.mrb[0].mxu0 %v500
      %v994 = vpop.f32.mrb[0].mxu0
      %v995 = vadd.f32 %v934, %v994
      %v996 = vpop.f32.mrb[0].mxu0
      %v997 = vpop.f32.mrb[0].mxu0
      %v998 = vadd.f32 %v934, %v997
      %v999 = vpop.f32.mrb[0].mxu0
      %1000 = vdwg.mxu0
      %v1001 = vmax.f32 %v971, 0.0
      %v1002 = vmax.f32 %v974, 0.0
      %v1003 = vmax.f32 %v979, 0.0
      %v1004 = vmax.f32 %v982, 0.0
      %v1005 = vmax.f32 %v987, 0.0
      %v1006 = vmax.f32 %v990, 0.0
      %v1007 = vmax.f32 %v995, 0.0
      %v1008 = vmax.f32 %v998, 0.0
      %vm1009 = vcmask 23552
      %1010 = vst.msk [vmem:[%s305] sm:$0xff] %vm1009, %v1001
      %1011 = vst.msk [vmem:[%s305 + $0x8] sm:$0xff] %vm1009, %v1002
      %1012 = vst.msk [vmem:[%s305 + $0x10] sm:$0xff] %vm1009, %v1003
      %1013 = vst.msk [vmem:[%s305 + $0x18] sm:$0xff] %vm1009, %v1004
      %1014 = vst.msk [vmem:[%s305 + $0x20] sm:$0xff] %vm1009, %v1005
      %1015 = vst.msk [vmem:[%s305 + $0x28] sm:$0xff] %vm1009, %v1006
      %1016 = vst.msk [vmem:[%s305 + $0x30] sm:$0xff] %vm1009, %v1007
      %1017 = vst.msk [vmem:[%s305 + $0x38] sm:$0xff] %vm1009, %v1008
      %p1018 = scmp.lt.s32.totalorder %s19, 1
      %s1019 = scalar_select %p1018, %s19, 1
      %s1020 = smul.addr %s1019, 8
      %s1021 = smul.addr %s1020, 8
      %s1022 = scalar_lea.vmem %s8, %s1021
      // Predicated region
      $region53: #{gcn_net_forward.2} parent=51 // pred_check
        %p1023 = pneg %p210
      $region54: #{gcn_net_forward.2} parent=51 // pred_check_branch
        %1025 = sbr.rel (%p1023) target = $region56
      $region55: #{gcn_net_forward.2} parent=51 // pred_region
        _
      $region56: #{gcn_net_forward.2} parent=51 // pred_fallthru
        _
    $region52: #{gcn_net_forward.2} parent=5 // pred_fallthru
      _
    %p1026 = scmp.le.s32.totalorder 2, %s14
    // Predicated region
    $region57: #{gcn_net_forward.2} parent=5 // pred_check
      %p1027 = pneg %p1026
    $region58: #{gcn_net_forward.2} parent=5 // pred_check_branch
      %1029 = sbr.rel (%p1027) target = $region60
    $region59: #{gcn_net_forward.2} parent=5 // pred_region
      %s1030 = ssub.s32 %s14, 2
      // Predicated region
      $region61: #{gcn_net_forward.2} parent=59 // pred_check
        %p1031 = pneg %p216
      $region62: #{gcn_net_forward.2} parent=59 // pred_check_branch
        %1033 = sbr.rel (%p1031) target = $region64
      $region63: #{gcn_net_forward.2} parent=59 // pred_region
        %p1034 = scmp.lt.s32.totalorder %s20, 1
        %s1035 = scalar_select %p1034, %s20, 1
        %s1036 = smul.addr %s1035, 8
        %s1037 = smul.addr %s1036, 8
        %s1038 = scalar_lea.vmem %s8, %s1037
      $region64: #{gcn_net_forward.2} parent=59 // pred_fallthru
        _
    $region60: #{gcn_net_forward.2} parent=5 // pred_fallthru
      _
  $region6: #{gcn_net_forward.2} parent=0 // loop_footer
    %s18 = sadd.s32 1, %s14
  $region7: #{gcn_net_forward.2} parent=0 // loop_footer_branch
    %13 = sbr.rel target = $region3
  $region8: #{gcn_net_forward.2} parent=0 // loop_exit
    _

</llo_original>
